<compile_context>
chip_gen: v5e
topology: v5e:2x2
jax: 0.10.0
libtpu: 0.0.40
codegen_flags: <defaults>
</compile_context>

<pallas_src>
import functools

import jax
import jax.numpy as jnp
from jax.experimental import pallas as pl
from jax.experimental.pallas import tpu as pltpu

LN_EPS = 1e-5


def prenorm_residual_kernel(x_ref, gamma_ref, beta_ref,
                            w1_ref, b1_ref, w2_ref, b2_ref,
                            o_ref):
    # NOTE: when the last row-block is ragged (N % TM != 0) the tail rows of
    # x_ref hold undefined data.  Everything below is strictly row-local
    # (LayerNorm over the last dim, per-row matmuls), so any garbage/NaN stays
    # confined to those rows and Pallas drops their writeback.  Do NOT add any
    # cross-row reduction to this kernel.
    x = x_ref[...].astype(jnp.float32)

    # --- LayerNorm over the last dim (matches nn.LayerNorm(dim)), f32 math ---
    mean = jnp.mean(x, axis=-1, keepdims=True)
    cent = x - mean
    var = jnp.mean(cent * cent, axis=-1, keepdims=True)
    xn = cent * jax.lax.rsqrt(var + LN_EPS)
    xn = xn * gamma_ref[...] + beta_ref[...]

    # --- fn: FeedForward MLP, bf16 MXU operands with f32 accumulation ---
    # TODO(synk): PyTorch nn.GELU defaults to the exact erf form; tanh-GELU
    # (EUP-friendly) is used here, differing at the ~1e-3 level.
    h = jnp.dot(xn.astype(w1_ref.dtype), w1_ref[...],
                preferred_element_type=jnp.float32) + b1_ref[...]
    h = jax.nn.gelu(h, approximate=True)
    y = jnp.dot(h.astype(w2_ref.dtype), w2_ref[...],
                preferred_element_type=jnp.float32) + b2_ref[...]

    # --- residual add, reusing the already-loaded f32 x ---
    o_ref[...] = (y + x).astype(o_ref.dtype)


def _round_up(x, m):
    return ((x + m - 1) // m) * m


def _pick_tm(n, tm_request):
    """Row tile: multiple of 8 sublanes, big (amortize per-step overhead), but
    capped so the grid keeps >= 2 steps for v7x's two TensorCores."""
    half = _round_up(pl.cdiv(n, 2), 8)
    tm = min(_round_up(tm_request, 8), half)
    return max(8, tm)


def _vmem_limit_bytes(tm, d, h, x_bytes, w_bytes):
    io_tiles = 2 * (2 * tm * d * x_bytes)          # x + out, double-buffered
    weights = 2 * (2 * d * h * w_bytes)            # w1 + w2, default 2x buffered
    small = 2 * (3 * d + h) * 4                    # gamma/beta/b1/b2 (f32)
    scratch = tm * h * 4 + 4 * tm * d * 4          # hidden + f32 LN temporaries
    est = int(1.25 * (io_tiles + weights + small + scratch)) + (2 << 20)
    try:
        phys = pltpu.get_tpu_info().vmem_capacity_bytes
    except Exception:
        phys = 64 * 1024 * 1024
    # ~80% of physical: ~102 MiB on v5e/v6e (128 MiB), ~51 MiB on v7x (64 MiB),
    # leaving headroom for compiler scratch / spills.
    cap = int(0.8 * phys)
    return max(32 * 1024 * 1024, min(est, cap))


def prepare_params(gamma, beta, w1, b1, w2, b2):
    """One-time cast/reshape, OUTSIDE the per-call path (hoists XLA converts):
    weights in bf16 (MXU-native, half the resident-weight DMA), small params
    reshaped to (1, K) f32."""
    return (gamma.reshape(1, -1).astype(jnp.float32),
            beta.reshape(1, -1).astype(jnp.float32),
            w1.astype(jnp.bfloat16),
            b1.reshape(1, -1).astype(jnp.float32),
            w2.astype(jnp.bfloat16),
            b2.reshape(1, -1).astype(jnp.float32))


@functools.partial(jax.jit, static_argnames=("tm",))
def prenorm_residual(x, gamma2d, beta2d, w1, b1_2d, w2, b2_2d, *, tm=1024):
    B, S, D = x.shape
    H = w1.shape[1]
    N = B * S

    TM = _pick_tm(N, tm)
    grid = (pl.cdiv(N, TM),)          # ragged last block handled by Pallas

    x2d = x.reshape(N, D)             # free (contiguous metadata reshape)

    row_spec = pl.BlockSpec((TM, D), lambda i: (i, 0))
    # Block index is constant -> weights/biases stay resident in VMEM across
    # grid steps (DMA'd once).
    # TODO(synk): for ViT-L-class dims on v7x, add pipeline_mode=pl.Buffered(1)
    # to these resident specs to drop their default 2x double-buffer VMEM cost.
    resident = lambda shape: pl.BlockSpec(shape, lambda i: (0, 0))

    out2d = pl.pallas_call(
        prenorm_residual_kernel,
        out_shape=jax.ShapeDtypeStruct((N, D), x.dtype),
        grid=grid,
        in_specs=[
            row_spec,             # x (row-tiled)
            resident((1, D)),     # gamma
            resident((1, D)),     # beta
            resident((D, H)),     # w1 (bf16, resident)
            resident((1, H)),     # b1
            resident((H, D)),     # w2 (bf16, resident)
            resident((1, D)),     # b2
        ],
        out_specs=row_spec,
        compiler_params=pltpu.CompilerParams(
            dimension_semantics=("parallel",),
            vmem_limit_bytes=_vmem_limit_bytes(
                TM, D, H, x.dtype.itemsize, w1.dtype.itemsize),
        ),
    )(x2d, gamma2d, beta2d, w1, b1_2d, w2, b2_2d)

    return out2d.reshape(B, S, D)


def reference(x, gamma, beta, w1, b1, w2, b2):
    # Emulates the kernel's precision policy (bf16 matmul operands, f32 accum).
    xf = x.astype(jnp.float32)
    mean = jnp.mean(xf, axis=-1, keepdims=True)
    var = jnp.mean((xf - mean) ** 2, axis=-1, keepdims=True)
    xn = (xf - mean) * jax.lax.rsqrt(var + LN_EPS) * gamma + beta
    h = jnp.dot(xn.astype(jnp.bfloat16), w1.astype(jnp.bfloat16),
                preferred_element_type=jnp.float32) + b1
    h = jax.nn.gelu(h, approximate=True)
    y = jnp.dot(h.astype(jnp.bfloat16), w2.astype(jnp.bfloat16),
                preferred_element_type=jnp.float32) + b2
    return (y + xf).astype(x.dtype)


if __name__ == "__main__":
    # ViT-ish small shapes: S = 197 (196 patches + cls) so N = 394 exercises a
    # ragged last block with no wrapper pad/slice; H = 4*D = 512 is a multiple
    # of 256 for the v6e/v7x MXU.  Activations in bf16 (halved HBM traffic).
    B, S, D = 2, 197, 128
    H = 4 * D

    key = jax.random.PRNGKey(0)
    kx, k1, k2 = jax.random.split(key, 3)

    x = jax.random.normal(kx, (B, S, D), dtype=jnp.float32).astype(jnp.bfloat16)

    gamma = jnp.ones((D,), jnp.float32)
    beta = jnp.zeros((D,), jnp.float32)
    w1 = jax.random.normal(k1, (D, H), dtype=jnp.float32) / jnp.sqrt(D)
    b1 = jnp.zeros((H,), jnp.float32)
    w2 = jax.random.normal(k2, (H, D), dtype=jnp.float32) / jnp.sqrt(H)
    b2 = jnp.zeros((D,), jnp.float32)

    # One-time parameter preparation (outside the per-call jit path).
    params = prepare_params(gamma, beta, w1, b1, w2, b2)

    out = prenorm_residual(x, *params)
    jax.block_until_ready(out)

    ref = reference(x, gamma, beta, w1, b1, w2, b2)
    assert out.shape == (B, S, D)
    assert out.dtype == x.dtype
    ok = jnp.allclose(out.astype(jnp.float32), ref.astype(jnp.float32),
                      atol=5e-2, rtol=5e-2)
    assert ok, "mismatch vs reference"

    print("KERNEL_OK")
</pallas_src>

<mosaic_0001>
module attributes {stable_mosaic.version = 11 : i64} {
  func.func @prenorm_residual_kernel(%arg0: i32, %arg1: memref<200x128xbf16, #tpu.memory_space<vmem>>, %arg2: memref<1x128xf32, #tpu.memory_space<vmem>>, %arg3: memref<1x128xf32, #tpu.memory_space<vmem>>, %arg4: memref<128x512xbf16, #tpu.memory_space<vmem>>, %arg5: memref<1x512xf32, #tpu.memory_space<vmem>>, %arg6: memref<512x128xbf16, #tpu.memory_space<vmem>>, %arg7: memref<1x128xf32, #tpu.memory_space<vmem>>, %arg8: memref<200x128xbf16, #tpu.memory_space<vmem>>) attributes {dimension_semantics = [#tpu.dimension_semantics<parallel>], iteration_bounds = array<i64: 2>, scalar_prefetch = 0 : i64, scratch_operands = 0 : i64, tpu.core_type = #tpu.core_type<tc>, window_params = [{transform_indices = @transform_0, window_bounds = array<i64: 200, 128>}, {pipeline_mode = #tpu.pipeline_mode<synchronous>, transform_indices = @transform_1, window_bounds = array<i64: 1, 128>}, {pipeline_mode = #tpu.pipeline_mode<synchronous>, transform_indices = @transform_2, window_bounds = array<i64: 1, 128>}, {pipeline_mode = #tpu.pipeline_mode<synchronous>, transform_indices = @transform_3, window_bounds = array<i64: 128, 512>}, {pipeline_mode = #tpu.pipeline_mode<synchronous>, transform_indices = @transform_4, window_bounds = array<i64: 1, 512>}, {pipeline_mode = #tpu.pipeline_mode<synchronous>, transform_indices = @transform_5, window_bounds = array<i64: 512, 128>}, {pipeline_mode = #tpu.pipeline_mode<synchronous>, transform_indices = @transform_6, window_bounds = array<i64: 1, 128>}, {transform_indices = @transform_7, window_bounds = array<i64: 200, 128>}]} {
    %c0 = arith.constant 0 : index
    %c0_0 = arith.constant 0 : index
    %0 = vector.load %arg1[%c0, %c0_0] : memref<200x128xbf16, #tpu.memory_space<vmem>>, vector<200x128xbf16>
    %1 = arith.extf %0 : vector<200x128xbf16> to vector<200x128xf32>
    %cst = arith.constant dense<0.000000e+00> : vector<200xf32>
    %2 = vector.multi_reduction <add>, %1, %cst [1] : vector<200x128xf32> to vector<200xf32>
    %3 = vector.shape_cast %2 : vector<200xf32> to vector<200x1xf32>
    %cst_1 = arith.constant 1.280000e+02 : f32
    %4 = vector.broadcast %cst_1 : f32 to vector<200x1xf32>
    %5 = arith.divf %3, %4 : vector<200x1xf32>
    %6 = vector.broadcast %5 : vector<200x1xf32> to vector<200x128xf32>
    %7 = arith.subf %1, %6 : vector<200x128xf32>
    %8 = arith.mulf %7, %7 : vector<200x128xf32>
    %cst_2 = arith.constant dense<0.000000e+00> : vector<200xf32>
    %9 = vector.multi_reduction <add>, %8, %cst_2 [1] : vector<200x128xf32> to vector<200xf32>
    %10 = vector.shape_cast %9 : vector<200xf32> to vector<200x1xf32>
    %cst_3 = arith.constant 1.280000e+02 : f32
    %11 = vector.broadcast %cst_3 : f32 to vector<200x1xf32>
    %12 = arith.divf %10, %11 : vector<200x1xf32>
    %cst_4 = arith.constant 9.99999974E-6 : f32
    %13 = vector.broadcast %cst_4 : f32 to vector<200x1xf32>
    %14 = arith.addf %12, %13 : vector<200x1xf32>
    %15 = math.rsqrt %14 : vector<200x1xf32>
    %16 = vector.broadcast %15 : vector<200x1xf32> to vector<200x128xf32>
    %17 = arith.mulf %7, %16 : vector<200x128xf32>
    %c0_5 = arith.constant 0 : index
    %c0_6 = arith.constant 0 : index
    %18 = vector.load %arg2[%c0_5, %c0_6] : memref<1x128xf32, #tpu.memory_space<vmem>>, vector<1x128xf32>
    %19 = vector.broadcast %18 : vector<1x128xf32> to vector<200x128xf32>
    %20 = arith.mulf %17, %19 : vector<200x128xf32>
    %c0_7 = arith.constant 0 : index
    %c0_8 = arith.constant 0 : index
    %21 = vector.load %arg3[%c0_7, %c0_8] : memref<1x128xf32, #tpu.memory_space<vmem>>, vector<1x128xf32>
    %22 = vector.broadcast %21 : vector<1x128xf32> to vector<200x128xf32>
    %23 = arith.addf %20, %22 : vector<200x128xf32>
    %24 = arith.truncf %23 : vector<200x128xf32> to vector<200x128xbf16>
    %c0_9 = arith.constant 0 : index
    %c0_10 = arith.constant 0 : index
    %25 = vector.load %arg4[%c0_9, %c0_10] : memref<128x512xbf16, #tpu.memory_space<vmem>>, vector<128x512xbf16>
    %cst_11 = arith.constant dense<0.000000e+00> : vector<200x512xf32>
    %26 = tpu.matmul %24, %25, %cst_11 {dimension_numbers = #tpu.dot_dimension_numbers<[1], [0], [0], [1], [0, 0, 1, 1], [], []>} : vector<200x128xbf16>, vector<128x512xbf16>, vector<200x512xf32> -> vector<200x512xf32>
    %c0_12 = arith.constant 0 : index
    %c0_13 = arith.constant 0 : index
    %27 = vector.load %arg5[%c0_12, %c0_13] : memref<1x512xf32, #tpu.memory_space<vmem>>, vector<1x512xf32>
    %28 = vector.broadcast %27 : vector<1x512xf32> to vector<200x512xf32>
    %29 = arith.addf %26, %28 : vector<200x512xf32>
    %30 = arith.mulf %29, %29 : vector<200x512xf32>
    %31 = arith.mulf %29, %30 : vector<200x512xf32>
    %cst_14 = arith.constant 4.471500e-02 : f32
    %32 = vector.broadcast %cst_14 : f32 to vector<200x512xf32>
    %33 = arith.mulf %32, %31 : vector<200x512xf32>
    %34 = arith.addf %29, %33 : vector<200x512xf32>
    %cst_15 = arith.constant 0.797884583 : f32
    %35 = vector.broadcast %cst_15 : f32 to vector<200x512xf32>
    %36 = arith.mulf %35, %34 : vector<200x512xf32>
    %37 = math.tanh %36 : vector<200x512xf32>
    %cst_16 = arith.constant 1.000000e+00 : f32
    %38 = vector.broadcast %cst_16 : f32 to vector<200x512xf32>
    %39 = arith.addf %38, %37 : vector<200x512xf32>
    %cst_17 = arith.constant 5.000000e-01 : f32
    %40 = vector.broadcast %cst_17 : f32 to vector<200x512xf32>
    %41 = arith.mulf %40, %39 : vector<200x512xf32>
    %42 = arith.mulf %29, %41 : vector<200x512xf32>
    %43 = arith.truncf %42 : vector<200x512xf32> to vector<200x512xbf16>
    %c0_18 = arith.constant 0 : index
    %c0_19 = arith.constant 0 : index
    %44 = vector.load %arg6[%c0_18, %c0_19] : memref<512x128xbf16, #tpu.memory_space<vmem>>, vector<512x128xbf16>
    %cst_20 = arith.constant dense<0.000000e+00> : vector<200x128xf32>
    %45 = tpu.matmul %43, %44, %cst_20 {dimension_numbers = #tpu.dot_dimension_numbers<[1], [0], [0], [1], [0, 0, 1, 1], [], []>} : vector<200x512xbf16>, vector<512x128xbf16>, vector<200x128xf32> -> vector<200x128xf32>
    %c0_21 = arith.constant 0 : index
    %c0_22 = arith.constant 0 : index
    %46 = vector.load %arg7[%c0_21, %c0_22] : memref<1x128xf32, #tpu.memory_space<vmem>>, vector<1x128xf32>
    %47 = vector.broadcast %46 : vector<1x128xf32> to vector<200x128xf32>
    %48 = arith.addf %45, %47 : vector<200x128xf32>
    %49 = arith.addf %48, %1 : vector<200x128xf32>
    %50 = arith.truncf %49 : vector<200x128xf32> to vector<200x128xbf16>
    %c0_23 = arith.constant 0 : index
    %c0_24 = arith.constant 0 : index
    %51 = vector.load %arg8[%c0_23, %c0_24] : memref<200x128xbf16, #tpu.memory_space<vmem>>, vector<200x128xbf16>
    tpu.vector_store %arg8[%c0_23, %c0_24], %50 {strides = array<i32>} : memref<200x128xbf16, #tpu.memory_space<vmem>>, vector<200x128xbf16>,
    return
  }
  func.func @transform_0(%arg0: i32) -> (i32, i32) {
    %c0_i32 = arith.constant 0 : i32
    %c0_i32_0 = arith.constant 0 : i32
    return %arg0, %c0_i32 : i32, i32
  }
  func.func @transform_1(%arg0: i32) -> (i32, i32) {
    %c0_i32 = arith.constant 0 : i32
    %c0_i32_0 = arith.constant 0 : i32
    %c0_i32_1 = arith.constant 0 : i32
    return %c0_i32, %c0_i32_0 : i32, i32
  }
  func.func @transform_2(%arg0: i32) -> (i32, i32) {
    %c0_i32 = arith.constant 0 : i32
    %c0_i32_0 = arith.constant 0 : i32
    %c0_i32_1 = arith.constant 0 : i32
    return %c0_i32, %c0_i32_0 : i32, i32
  }
  func.func @transform_3(%arg0: i32) -> (i32, i32) {
    %c0_i32 = arith.constant 0 : i32
    %c0_i32_0 = arith.constant 0 : i32
    %c0_i32_1 = arith.constant 0 : i32
    return %c0_i32, %c0_i32_0 : i32, i32
  }
  func.func @transform_4(%arg0: i32) -> (i32, i32) {
    %c0_i32 = arith.constant 0 : i32
    %c0_i32_0 = arith.constant 0 : i32
    %c0_i32_1 = arith.constant 0 : i32
    return %c0_i32, %c0_i32_0 : i32, i32
  }
  func.func @transform_5(%arg0: i32) -> (i32, i32) {
    %c0_i32 = arith.constant 0 : i32
    %c0_i32_0 = arith.constant 0 : i32
    %c0_i32_1 = arith.constant 0 : i32
    return %c0_i32, %c0_i32_0 : i32, i32
  }
  func.func @transform_6(%arg0: i32) -> (i32, i32) {
    %c0_i32 = arith.constant 0 : i32
    %c0_i32_0 = arith.constant 0 : i32
    %c0_i32_1 = arith.constant 0 : i32
    return %c0_i32, %c0_i32_0 : i32, i32
  }
  func.func @transform_7(%arg0: i32) -> (i32, i32) {
    %c0_i32 = arith.constant 0 : i32
    %c0_i32_0 = arith.constant 0 : i32
    return %arg0, %c0_i32 : i32, i32
  }
}

</mosaic_0001>

<llo_original>
// kernel: prenorm_residual.1
$region0: #{prenorm_residual.1}
  #allocation0 [shape = 'u32[]', space=smem, size = 0x4, offset = 0x4, fixed_abs, tag = 'smem constant byte address 0x4 - core index']
  #allocation1 [shape = 'u32[72,128]{1,0:T(1,128)}', space=vmem, size = 0x9000, scoped, tag = 'internal scratch']
  %s0 = inlined_call_operand.vmem [shape: bf16[394,128], index: 0, kind: input, shape index: {}]
  %s1 = inlined_call_operand.vmem [shape: f32[1,128], index: 1, kind: input, shape index: {}]
  %s2 = inlined_call_operand.vmem [shape: f32[1,128], index: 2, kind: input, shape index: {}]
  %s3 = inlined_call_operand.vmem [shape: bf16[128,512], index: 3, kind: input, shape index: {}]
  %s4 = inlined_call_operand.vmem [shape: f32[1,512], index: 4, kind: input, shape index: {}]
  %s5 = inlined_call_operand.vmem [shape: bf16[512,128], index: 5, kind: input, shape index: {}]
  %s6 = inlined_call_operand.vmem [shape: f32[1,128], index: 6, kind: input, shape index: {}]
  %s7 = inlined_call_operand.vmem [shape: bf16[394,128], index: 7, kind: output, shape index: {}]
  %s8 = sld [smem:[#allocation0]]
  $region61: #{prenorm_residual.1} parent=0
    _
  %s10 = ssub.s32 1, %s8
  %s11 = scalar_select 0, %s10, %s8
  loop: start=0, step=1, limit=4
  $region2: #{prenorm_residual.1} parent=0 // loop_pre_header
    _
  $region3: #{prenorm_residual.1} parent=0 // loop_header
    %s13 = sphi 0, %s17
    %p14 = scmp.ge.s32.totalorder %s13, 4
    %s23 = sphi 0, %s25
    %s26 = sphi 0, %s23
    %s27 = sphi 0, %s26
    %s43 = sphi 0, %s27
    %s47 = sphi 0, %s47
    %s49 = sphi 0, %s47
    %s50 = sphi 0, %s49
    %s64 = sphi 0, %s50
    %s68 = sphi 0, %s68
    %s70 = sphi 0, %s68
    %s71 = sphi 0, %s70
    %s85 = sphi 0, %s71
    %s89 = sphi 0, %s89
    %s91 = sphi 0, %s89
    %s92 = sphi 0, %s91
    %s106 = sphi 0, %s92
    %s110 = sphi 0, %s110
    %s112 = sphi 0, %s110
    %s113 = sphi 0, %s112
    %s127 = sphi 0, %s113
    %s131 = sphi 0, %s131
    %s133 = sphi 0, %s131
    %s134 = sphi 0, %s133
    %s148 = sphi 0, %s134
    %s152 = sphi 0, %s152
    %s154 = sphi 0, %s152
    %s155 = sphi 0, %s154
    %s169 = sphi 0, %s155
    %s175 = sphi 0, %s177
    %s178 = sphi 0, %s175
    %s179 = sphi 0, %s178
    %s195 = sphi 0, %s179
  $region4: #{prenorm_residual.1} parent=0 // loop_header_branch
    %16 = sbr.rel (%p14) target = $region8
  $region5: #{prenorm_residual.1} parent=0 // loop_body
    %s18 = ssub.s32 %s13, 1
    %s19 = ssub.s32 %s13, 2
    %s20 = sadd.s32 %s13, 1
    %s21 = ssub.s32 %s13, %s20
    %p22 = scmp.eq.s32.totalorder %s21, 0
    %s24 = sadd.s32 %s23, 1
    %s25 = scalar_select %p22, %s23, %s24
    %p28 = pneg %p22
    %p29 = scmp.eq.s32.totalorder %s13, 1
    %p30 = por %p28, %p29
    %p31 = scmp.ne.s32.totalorder %s23, %s26
    %p32 = scmp.eq.s32.totalorder %s13, 0
    %p33 = por %p31, %p32
    %p34 = scmp.ne.s32.totalorder %s23, %s26
    %p35 = scmp.eq.s32.totalorder %s18, 1
    %p36 = por %p34, %p35
    %p37 = scmp.ne.s32.totalorder %s26, %s27
    %p38 = scmp.eq.s32.totalorder %s18, 0
    %p39 = por %p37, %p38
    %p40 = scmp.ne.s32.totalorder %s26, %s27
    %p41 = scmp.eq.s32.totalorder %s19, 1
    %p42 = por %p40, %p41
    %p44 = scmp.ne.s32.totalorder %s27, %s43
    %p45 = scmp.eq.s32.totalorder %s19, 0
    %p46 = por %p44, %p45
    %s48 = sadd.s32 %s47, 1
    %p51 = scmp.eq.s32.totalorder %s13, 1
    %p52 = scmp.ne.s32.totalorder %s47, %s49
    %p53 = scmp.eq.s32.totalorder %s13, 0
    %p54 = por %p52, %p53
    %p55 = scmp.ne.s32.totalorder %s47, %s49
    %p56 = scmp.eq.s32.totalorder %s18, 1
    %p57 = por %p55, %p56
    %p58 = scmp.ne.s32.totalorder %s49, %s50
    %p59 = scmp.eq.s32.totalorder %s18, 0
    %p60 = por %p58, %p59
    %p61 = scmp.ne.s32.totalorder %s49, %s50
    %p62 = scmp.eq.s32.totalorder %s19, 1
    %p63 = por %p61, %p62
    %p65 = scmp.ne.s32.totalorder %s50, %s64
    %p66 = scmp.eq.s32.totalorder %s19, 0
    %p67 = por %p65, %p66
    %s69 = sadd.s32 %s68, 1
    %p72 = scmp.eq.s32.totalorder %s13, 1
    %p73 = scmp.ne.s32.totalorder %s68, %s70
    %p74 = scmp.eq.s32.totalorder %s13, 0
    %p75 = por %p73, %p74
    %p76 = scmp.ne.s32.totalorder %s68, %s70
    %p77 = scmp.eq.s32.totalorder %s18, 1
    %p78 = por %p76, %p77
    %p79 = scmp.ne.s32.totalorder %s70, %s71
    %p80 = scmp.eq.s32.totalorder %s18, 0
    %p81 = por %p79, %p80
    %p82 = scmp.ne.s32.totalorder %s70, %s71
    %p83 = scmp.eq.s32.totalorder %s19, 1
    %p84 = por %p82, %p83
    %p86 = scmp.ne.s32.totalorder %s71, %s85
    %p87 = scmp.eq.s32.totalorder %s19, 0
    %p88 = por %p86, %p87
    %s90 = sadd.s32 %s89, 1
    %p93 = scmp.eq.s32.totalorder %s13, 1
    %p94 = scmp.ne.s32.totalorder %s89, %s91
    %p95 = scmp.eq.s32.totalorder %s13, 0
    %p96 = por %p94, %p95
    %p97 = scmp.ne.s32.totalorder %s89, %s91
    %p98 = scmp.eq.s32.totalorder %s18, 1
    %p99 = por %p97, %p98
    %p100 = scmp.ne.s32.totalorder %s91, %s92
    %p101 = scmp.eq.s32.totalorder %s18, 0
    %p102 = por %p100, %p101
    %p103 = scmp.ne.s32.totalorder %s91, %s92
    %p104 = scmp.eq.s32.totalorder %s19, 1
    %p105 = por %p103, %p104
    %p107 = scmp.ne.s32.totalorder %s92, %s106
    %p108 = scmp.eq.s32.totalorder %s19, 0
    %p109 = por %p107, %p108
    %s111 = sadd.s32 %s110, 1
    %p114 = scmp.eq.s32.totalorder %s13, 1
    %p115 = scmp.ne.s32.totalorder %s110, %s112
    %p116 = scmp.eq.s32.totalorder %s13, 0
    %p117 = por %p115, %p116
    %p118 = scmp.ne.s32.totalorder %s110, %s112
    %p119 = scmp.eq.s32.totalorder %s18, 1
    %p120 = por %p118, %p119
    %p121 = scmp.ne.s32.totalorder %s112, %s113
    %p122 = scmp.eq.s32.totalorder %s18, 0
    %p123 = por %p121, %p122
    %p124 = scmp.ne.s32.totalorder %s112, %s113
    %p125 = scmp.eq.s32.totalorder %s19, 1
    %p126 = por %p124, %p125
    %p128 = scmp.ne.s32.totalorder %s113, %s127
    %p129 = scmp.eq.s32.totalorder %s19, 0
    %p130 = por %p128, %p129
    %s132 = sadd.s32 %s131, 1
    %p135 = scmp.eq.s32.totalorder %s13, 1
    %p136 = scmp.ne.s32.totalorder %s131, %s133
    %p137 = scmp.eq.s32.totalorder %s13, 0
    %p138 = por %p136, %p137
    %p139 = scmp.ne.s32.totalorder %s131, %s133
    %p140 = scmp.eq.s32.totalorder %s18, 1
    %p141 = por %p139, %p140
    %p142 = scmp.ne.s32.totalorder %s133, %s134
    %p143 = scmp.eq.s32.totalorder %s18, 0
    %p144 = por %p142, %p143
    %p145 = scmp.ne.s32.totalorder %s133, %s134
    %p146 = scmp.eq.s32.totalorder %s19, 1
    %p147 = por %p145, %p146
    %p149 = scmp.ne.s32.totalorder %s134, %s148
    %p150 = scmp.eq.s32.totalorder %s19, 0
    %p151 = por %p149, %p150
    %s153 = sadd.s32 %s152, 1
    %p156 = scmp.eq.s32.totalorder %s13, 1
    %p157 = scmp.ne.s32.totalorder %s152, %s154
    %p158 = scmp.eq.s32.totalorder %s13, 0
    %p159 = por %p157, %p158
    %p160 = scmp.ne.s32.totalorder %s152, %s154
    %p161 = scmp.eq.s32.totalorder %s18, 1
    %p162 = por %p160, %p161
    %p163 = scmp.ne.s32.totalorder %s154, %s155
    %p164 = scmp.eq.s32.totalorder %s18, 0
    %p165 = por %p163, %p164
    %p166 = scmp.ne.s32.totalorder %s154, %s155
    %p167 = scmp.eq.s32.totalorder %s19, 1
    %p168 = por %p166, %p167
    %p170 = scmp.ne.s32.totalorder %s155, %s169
    %p171 = scmp.eq.s32.totalorder %s19, 0
    %p172 = por %p170, %p171
    %s173 = ssub.s32 %s13, %s20
    %p174 = scmp.eq.s32.totalorder %s173, 0
    %s176 = sadd.s32 %s175, 1
    %s177 = scalar_select %p174, %s175, %s176
    %p180 = pneg %p174
    %p181 = scmp.eq.s32.totalorder %s13, 1
    %p182 = por %p180, %p181
    %p183 = scmp.ne.s32.totalorder %s175, %s178
    %p184 = scmp.eq.s32.totalorder %s13, 0
    %p185 = por %p183, %p184
    %p186 = scmp.ne.s32.totalorder %s175, %s178
    %p187 = scmp.eq.s32.totalorder %s18, 1
    %p188 = por %p186, %p187
    %p189 = scmp.ne.s32.totalorder %s178, %s179
    %p190 = scmp.eq.s32.totalorder %s18, 0
    %p191 = por %p189, %p190
    %p192 = scmp.ne.s32.totalorder %s178, %s179
    %p193 = scmp.eq.s32.totalorder %s19, 1
    %p194 = por %p192, %p193
    %p196 = scmp.ne.s32.totalorder %s179, %s195
    %p197 = scmp.eq.s32.totalorder %s19, 0
    %p198 = por %p196, %p197
    %p199 = scmp.le.s32.totalorder 1, %s13
    %p200 = scmp.lt.s32.totalorder %s13, 3
    %p201 = pnand %p199, %p200
    %p202 = pneg %p201
    // Predicated region
    $region9: #{prenorm_residual.1} parent=5 // pred_check
      _
    $region10: #{prenorm_residual.1} parent=5 // pred_check_branch
      %204 = sbr.rel (%p201) target = $region12
    $region11: #{prenorm_residual.1} parent=5 // pred_region
      %s205 = ssub.s32 %s13, 1
      // Predicated region
      $region13: #{prenorm_residual.1} parent=11 // pred_check
        %p206 = pneg %p60
      $region14: #{prenorm_residual.1} parent=11 // pred_check_branch
        %208 = sbr.rel (%p206) target = $region16
      $region15: #{prenorm_residual.1} parent=11 // pred_region
        _
      $region16: #{prenorm_residual.1} parent=11 // pred_fallthru
        _
      // Predicated region
      $region17: #{prenorm_residual.1} parent=11 // pred_check
        %p209 = pneg %p81
      $region18: #{prenorm_residual.1} parent=11 // pred_check_branch
        %211 = sbr.rel (%p209) target = $region20
      $region19: #{prenorm_residual.1} parent=11 // pred_region
        _
      $region20: #{prenorm_residual.1} parent=11 // pred_fallthru
        _
      // Predicated region
      $region21: #{prenorm_residual.1} parent=11 // pred_check
        %p212 = pneg %p102
      $region22: #{prenorm_residual.1} parent=11 // pred_check_branch
        %214 = sbr.rel (%p212) target = $region24
      $region23: #{prenorm_residual.1} parent=11 // pred_region
        _
      $region24: #{prenorm_residual.1} parent=11 // pred_fallthru
        _
      // Predicated region
      $region25: #{prenorm_residual.1} parent=11 // pred_check
        %p215 = pneg %p123
      $region26: #{prenorm_residual.1} parent=11 // pred_check_branch
        %217 = sbr.rel (%p215) target = $region28
      $region27: #{prenorm_residual.1} parent=11 // pred_region
        _
      $region28: #{prenorm_residual.1} parent=11 // pred_fallthru
        _
      // Predicated region
      $region29: #{prenorm_residual.1} parent=11 // pred_check
        %p218 = pneg %p144
      $region30: #{prenorm_residual.1} parent=11 // pred_check_branch
        %220 = sbr.rel (%p218) target = $region32
      $region31: #{prenorm_residual.1} parent=11 // pred_region
        _
      $region32: #{prenorm_residual.1} parent=11 // pred_fallthru
        _
      // Predicated region
      $region33: #{prenorm_residual.1} parent=11 // pred_check
        %p221 = pneg %p165
      $region34: #{prenorm_residual.1} parent=11 // pred_check_branch
        %223 = sbr.rel (%p221) target = $region36
      $region35: #{prenorm_residual.1} parent=11 // pred_region
        _
      $region36: #{prenorm_residual.1} parent=11 // pred_fallthru
        _
    $region12: #{prenorm_residual.1} parent=5 // pred_fallthru
      _
    %p224 = scmp.lt.s32.totalorder %s13, 2
    // Predicated region
    $region37: #{prenorm_residual.1} parent=5 // pred_check
      %p225 = pneg %p224
    $region38: #{prenorm_residual.1} parent=5 // pred_check_branch
      %227 = sbr.rel (%p225) target = $region40
    $region39: #{prenorm_residual.1} parent=5 // pred_region
      // Predicated region
      $region41: #{prenorm_residual.1} parent=39 // pred_check
        %p228 = pneg %p33
      $region42: #{prenorm_residual.1} parent=39 // pred_check_branch
        %230 = sbr.rel (%p228) target = $region44
      $region43: #{prenorm_residual.1} parent=39 // pred_region
        %s231 = smul.u32 25, %s13
        %p232 = scmp.lt.s32.totalorder %s231, 49
        %s233 = scalar_select %p232, %s231, 49
        %s234 = smul.addr %s233, 4
        %s235 = scalar_lea.vmem %s0, %s234
        %s236 = smul.u32 25, %s13
      $region44: #{prenorm_residual.1} parent=39 // pred_fallthru
        _
    $region40: #{prenorm_residual.1} parent=5 // pred_fallthru
      _
    %p237 = scmp.le.s32.totalorder 1, %s13
    %p238 = scmp.lt.s32.totalorder %s13, 3
    %p239 = pnand %p237, %p238
    %p240 = pneg %p239
    // Predicated region
    $region45: #{prenorm_residual.1} parent=5 // pred_check
      _
    $region46: #{prenorm_residual.1} parent=5 // pred_check_branch
      %242 = sbr.rel (%p239) target = $region48
    $region47: #{prenorm_residual.1} parent=5 // pred_region
      %s243 = ssub.s32 %s13, 1
      %s244 = smul.u32 25, %s18
      %p245 = scmp.lt.s32.totalorder %s244, 49
      %s246 = scalar_select %p245, %s244, 49
      %s247 = smul.addr %s246, 4
      %s248 = scalar_lea.vmem %s0, %s247
      %p249 = pneg %p39
      %p250 = pneg %p36
      %p251 = pneg %p60
      %p252 = pneg %p57
      %p253 = pneg %p81
      %p254 = pneg %p78
      %p255 = pneg %p102
      %p256 = pneg %p99
      %p257 = pneg %p123
      %p258 = pneg %p120
      %p259 = pneg %p144
      %p260 = pneg %p141
      %p261 = pneg %p165
      %p262 = pneg %p162
      %p263 = pneg %p191
      %p264 = pneg %p188
      %s265 = smul.u32 25, %s18
      %p266 = scmp.lt.s32.totalorder %s265, 49
      %s267 = scalar_select %p266, %s265, 49
      %s268 = smul.addr %s267, 4
      %s269 = scalar_lea.vmem %s7, %s268
      %s270 = smul.u32 25, %s18
      %p271 = scmp.lt.s32.totalorder %s270, 49
      %s272 = scalar_select %p271, %s270, 49
      %s273 = smul.addr %s272, 4
      %s274 = scalar_lea.vmem %s0, %s273
      %s275 = smul.u32 25, %s18
      %s276 = smul.u32 25, %s18
      %p277 = scmp.lt.s32.totalorder %s276, 49
      %s278 = scalar_select %p277, %s276, 49
      %s279 = smul.addr %s278, 4
      %s280 = scalar_lea.vmem %s7, %s279
      %s281 = smul.u32 25, %s18
      %v282 = vld [vmem:[%s274] sm:$0xf]
      %v283 = vld [vmem:[%s274 + $0x4] sm:$0xf]
      %v284 = vld [vmem:[%s274 + $0x8] sm:$0xf]
      %v285 = vld [vmem:[%s274 + $0xc] sm:$0xf]
      %v286 = vld [vmem:[%s274 + $0x10] sm:$0xf]
      %v287 = vld [vmem:[%s274 + $0x14] sm:$0xf]
      %v288 = vld [vmem:[%s274 + $0x18] sm:$0xf]
      %v289 = vld [vmem:[%s274 + $0x1c] sm:$0xf]
      %v290 = vld [vmem:[%s274 + $0x20] sm:$0xf]
      %v291 = vld [vmem:[%s274 + $0x24] sm:$0xf]
      %v292 = vld [vmem:[%s274 + $0x28] sm:$0xf]
      %v293 = vld [vmem:[%s274 + $0x2c] sm:$0xf]
      %v294 = vld [vmem:[%s274 + $0x30] sm:$0xf]
      %v295 = vld [vmem:[%s274 + $0x34] sm:$0xf]
      %v296 = vld [vmem:[%s274 + $0x38] sm:$0xf]
      %v297 = vld [vmem:[%s274 + $0x3c] sm:$0xf]
      %v298 = vld [vmem:[%s274 + $0x40] sm:$0xf]
      %v299 = vld [vmem:[%s274 + $0x44] sm:$0xf]
      %v300 = vld [vmem:[%s274 + $0x48] sm:$0xf]
      %v301 = vld [vmem:[%s274 + $0x4c] sm:$0xf]
      %v302 = vld [vmem:[%s274 + $0x50] sm:$0xf]
      %v303 = vld [vmem:[%s274 + $0x54] sm:$0xf]
      %v304 = vld [vmem:[%s274 + $0x58] sm:$0xf]
      %v305 = vld [vmem:[%s274 + $0x5c] sm:$0xf]
      %v306 = vld [vmem:[%s274 + $0x60] sm:$0xf]
      %v307 = vunpack.c.l.bf16 %v282
      %v308 = vunpack.c.l.bf16 %v283
      %v309 = vunpack.c.l.bf16 %v284
      %v310 = vunpack.c.l.bf16 %v285
      %v311 = vunpack.c.l.bf16 %v286
      %v312 = vunpack.c.l.bf16 %v287
      %v313 = vunpack.c.l.bf16 %v288
      %v314 = vunpack.c.l.bf16 %v289
      %v315 = vunpack.c.l.bf16 %v290
      %v316 = vunpack.c.l.bf16 %v291
      %v317 = vunpack.c.l.bf16 %v292
      %v318 = vunpack.c.l.bf16 %v293
      %v319 = vunpack.c.l.bf16 %v294
      %v320 = vunpack.c.l.bf16 %v295
      %v321 = vunpack.c.l.bf16 %v296
      %v322 = vunpack.c.l.bf16 %v297
      %v323 = vunpack.c.l.bf16 %v298
      %v324 = vunpack.c.l.bf16 %v299
      %v325 = vunpack.c.l.bf16 %v300
      %v326 = vunpack.c.l.bf16 %v301
      %v327 = vunpack.c.l.bf16 %v302
      %v328 = vunpack.c.l.bf16 %v303
      %v329 = vunpack.c.l.bf16 %v304
      %v330 = vunpack.c.l.bf16 %v305
      %v331 = vunpack.c.l.bf16 %v306
      %332 = vadd.xlane.f32.xlu0 %v307
      %v333 = vpop.xlane.xlu0 %332
      %334 = vadd.xlane.f32.xlu0 %v308
      %v335 = vpop.xlane.xlu0 %334
      %336 = vadd.xlane.f32.xlu0 %v309
      %v337 = vpop.xlane.xlu0 %336
      %338 = vadd.xlane.f32.xlu0 %v310
      %v339 = vpop.xlane.xlu0 %338
      %340 = vadd.xlane.f32.xlu0 %v311
      %v341 = vpop.xlane.xlu0 %340
      %342 = vadd.xlane.f32.xlu0 %v312
      %v343 = vpop.xlane.xlu0 %342
      %344 = vadd.xlane.f32.xlu0 %v313
      %v345 = vpop.xlane.xlu0 %344
      %346 = vadd.xlane.f32.xlu0 %v314
      %v347 = vpop.xlane.xlu0 %346
      %348 = vadd.xlane.f32.xlu0 %v315
      %v349 = vpop.xlane.xlu0 %348
      %350 = vadd.xlane.f32.xlu0 %v316
      %v351 = vpop.xlane.xlu0 %350
      %352 = vadd.xlane.f32.xlu0 %v317
      %v353 = vpop.xlane.xlu0 %352
      %354 = vadd.xlane.f32.xlu0 %v318
      %v355 = vpop.xlane.xlu0 %354
      %356 = vadd.xlane.f32.xlu0 %v319
      %v357 = vpop.xlane.xlu0 %356
      %358 = vadd.xlane.f32.xlu0 %v320
      %v359 = vpop.xlane.xlu0 %358
      %360 = vadd.xlane.f32.xlu0 %v321
      %v361 = vpop.xlane.xlu0 %360
      %362 = vadd.xlane.f32.xlu0 %v322
      %v363 = vpop.xlane.xlu0 %362
      %364 = vadd.xlane.f32.xlu0 %v323
      %v365 = vpop.xlane.xlu0 %364
      %366 = vadd.xlane.f32.xlu0 %v324
      %v367 = vpop.xlane.xlu0 %366
      %368 = vadd.xlane.f32.xlu0 %v325
      %v369 = vpop.xlane.xlu0 %368
      %370 = vadd.xlane.f32.xlu0 %v326
      %v371 = vpop.xlane.xlu0 %370
      %372 = vadd.xlane.f32.xlu0 %v327
      %v373 = vpop.xlane.xlu0 %372
      %374 = vadd.xlane.f32.xlu0 %v328
      %v375 = vpop.xlane.xlu0 %374
      %376 = vadd.xlane.f32.xlu0 %v329
      %v377 = vpop.xlane.xlu0 %376
      %378 = vadd.xlane.f32.xlu0 %v330
      %v379 = vpop.xlane.xlu0 %378
      %380 = vadd.xlane.f32.xlu0 %v331
      %v381 = vpop.xlane.xlu0 %380
      %v382 = vrcp.pop 128.0
      %v383 = vmul.f32 128.0, %v382
      %v384 = vsub.f32 1.0, %v383
      %v385 = vmul.f32 %v382, %v384
      %v386 = vadd.f32 %v382, %v385
      %vm387 = vweird.f32 %v382
      %v388 = vsel %vm387, %v382, %v386
      %v389 = vmul.f32 %v333, %v388
      %v390 = vmul.f32 %v335, %v388
      %v391 = vmul.f32 %v337, %v388
      %v392 = vmul.f32 %v339, %v388
      %v393 = vmul.f32 %v341, %v388
      %v394 = vmul.f32 %v343, %v388
      %v395 = vmul.f32 %v345, %v388
      %v396 = vmul.f32 %v347, %v388
      %v397 = vmul.f32 %v349, %v388
      %v398 = vmul.f32 %v351, %v388
      %v399 = vmul.f32 %v353, %v388
      %v400 = vmul.f32 %v355, %v388
      %v401 = vmul.f32 %v357, %v388
      %v402 = vmul.f32 %v359, %v388
      %v403 = vmul.f32 %v361, %v388
      %v404 = vmul.f32 %v363, %v388
      %v405 = vmul.f32 %v365, %v388
      %v406 = vmul.f32 %v367, %v388
      %v407 = vmul.f32 %v369, %v388
      %v408 = vmul.f32 %v371, %v388
      %v409 = vmul.f32 %v373, %v388
      %v410 = vmul.f32 %v375, %v388
      %v411 = vmul.f32 %v377, %v388
      %v412 = vmul.f32 %v379, %v388
      %v413 = vmul.f32 %v381, %v388
      %v414 = vsub.f32 %v307, %v389
      %v415 = vsub.f32 %v308, %v390
      %v416 = vsub.f32 %v309, %v391
      %v417 = vsub.f32 %v310, %v392
      %v418 = vsub.f32 %v311, %v393
      %v419 = vsub.f32 %v312, %v394
      %v420 = vsub.f32 %v313, %v395
      %v421 = vsub.f32 %v314, %v396
      %v422 = vsub.f32 %v315, %v397
      %v423 = vsub.f32 %v316, %v398
      %v424 = vsub.f32 %v317, %v399
      %v425 = vsub.f32 %v318, %v400
      %v426 = vsub.f32 %v319, %v401
      %v427 = vsub.f32 %v320, %v402
      %v428 = vsub.f32 %v321, %v403
      %v429 = vsub.f32 %v322, %v404
      %v430 = vsub.f32 %v323, %v405
      %v431 = vsub.f32 %v324, %v406
      %v432 = vsub.f32 %v325, %v407
      %v433 = vsub.f32 %v326, %v408
      %v434 = vsub.f32 %v327, %v409
      %v435 = vsub.f32 %v328, %v410
      %v436 = vsub.f32 %v329, %v411
      %v437 = vsub.f32 %v330, %v412
      %v438 = vsub.f32 %v331, %v413
      %v439 = vmul.f32 %v414, %v414
      %v440 = vmul.f32 %v415, %v415
      %v441 = vmul.f32 %v416, %v416
      %v442 = vmul.f32 %v417, %v417
      %v443 = vmul.f32 %v418, %v418
      %v444 = vmul.f32 %v419, %v419
      %v445 = vmul.f32 %v420, %v420
      %v446 = vmul.f32 %v421, %v421
      %v447 = vmul.f32 %v422, %v422
      %v448 = vmul.f32 %v423, %v423
      %v449 = vmul.f32 %v424, %v424
      %v450 = vmul.f32 %v425, %v425
      %v451 = vmul.f32 %v426, %v426
      %v452 = vmul.f32 %v427, %v427
      %v453 = vmul.f32 %v428, %v428
      %v454 = vmul.f32 %v429, %v429
      %v455 = vmul.f32 %v430, %v430
      %v456 = vmul.f32 %v431, %v431
      %v457 = vmul.f32 %v432, %v432
      %v458 = vmul.f32 %v433, %v433
      %v459 = vmul.f32 %v434, %v434
      %v460 = vmul.f32 %v435, %v435
      %v461 = vmul.f32 %v436, %v436
      %v462 = vmul.f32 %v437, %v437
      %v463 = vmul.f32 %v438, %v438
      %464 = vadd.xlane.f32.xlu0 %v439
      %v465 = vpop.xlane.xlu0 %464
      %466 = vadd.xlane.f32.xlu0 %v440
      %v467 = vpop.xlane.xlu0 %466
      %468 = vadd.xlane.f32.xlu0 %v441
      %v469 = vpop.xlane.xlu0 %468
      %470 = vadd.xlane.f32.xlu0 %v442
      %v471 = vpop.xlane.xlu0 %470
      %472 = vadd.xlane.f32.xlu0 %v443
      %v473 = vpop.xlane.xlu0 %472
      %474 = vadd.xlane.f32.xlu0 %v444
      %v475 = vpop.xlane.xlu0 %474
      %476 = vadd.xlane.f32.xlu0 %v445
      %v477 = vpop.xlane.xlu0 %476
      %478 = vadd.xlane.f32.xlu0 %v446
      %v479 = vpop.xlane.xlu0 %478
      %480 = vadd.xlane.f32.xlu0 %v447
      %v481 = vpop.xlane.xlu0 %480
      %482 = vadd.xlane.f32.xlu0 %v448
      %v483 = vpop.xlane.xlu0 %482
      %484 = vadd.xlane.f32.xlu0 %v449
      %v485 = vpop.xlane.xlu0 %484
      %486 = vadd.xlane.f32.xlu0 %v450
      %v487 = vpop.xlane.xlu0 %486
      %488 = vadd.xlane.f32.xlu0 %v451
      %v489 = vpop.xlane.xlu0 %488
      %490 = vadd.xlane.f32.xlu0 %v452
      %v491 = vpop.xlane.xlu0 %490
      %492 = vadd.xlane.f32.xlu0 %v453
      %v493 = vpop.xlane.xlu0 %492
      %494 = vadd.xlane.f32.xlu0 %v454
      %v495 = vpop.xlane.xlu0 %494
      %496 = vadd.xlane.f32.xlu0 %v455
      %v497 = vpop.xlane.xlu0 %496
      %498 = vadd.xlane.f32.xlu0 %v456
      %v499 = vpop.xlane.xlu0 %498
      %500 = vadd.xlane.f32.xlu0 %v457
      %v501 = vpop.xlane.xlu0 %500
      %502 = vadd.xlane.f32.xlu0 %v458
      %v503 = vpop.xlane.xlu0 %502
      %504 = vadd.xlane.f32.xlu0 %v459
      %v505 = vpop.xlane.xlu0 %504
      %506 = vadd.xlane.f32.xlu0 %v460
      %v507 = vpop.xlane.xlu0 %506
      %508 = vadd.xlane.f32.xlu0 %v461
      %v509 = vpop.xlane.xlu0 %508
      %510 = vadd.xlane.f32.xlu0 %v462
      %v511 = vpop.xlane.xlu0 %510
      %512 = vadd.xlane.f32.xlu0 %v463
      %v513 = vpop.xlane.xlu0 %512
      %v514 = vmul.f32 %v465, %v388
      %v515 = vmul.f32 %v467, %v388
      %v516 = vmul.f32 %v469, %v388
      %v517 = vmul.f32 %v471, %v388
      %v518 = vmul.f32 %v473, %v388
      %v519 = vmul.f32 %v475, %v388
      %v520 = vmul.f32 %v477, %v388
      %v521 = vmul.f32 %v479, %v388
      %v522 = vmul.f32 %v481, %v388
      %v523 = vmul.f32 %v483, %v388
      %v524 = vmul.f32 %v485, %v388
      %v525 = vmul.f32 %v487, %v388
      %v526 = vmul.f32 %v489, %v388
      %v527 = vmul.f32 %v491, %v388
      %v528 = vmul.f32 %v493, %v388
      %v529 = vmul.f32 %v495, %v388
      %v530 = vmul.f32 %v497, %v388
      %v531 = vmul.f32 %v499, %v388
      %v532 = vmul.f32 %v501, %v388
      %v533 = vmul.f32 %v503, %v388
      %v534 = vmul.f32 %v505, %v388
      %v535 = vmul.f32 %v507, %v388
      %v536 = vmul.f32 %v509, %v388
      %v537 = vmul.f32 %v511, %v388
      %v538 = vmul.f32 %v513, %v388
      %v539 = vadd.f32 %v514, 1e-05
      %v540 = vadd.f32 %v515, 1e-05
      %v541 = vadd.f32 %v516, 1e-05
      %v542 = vadd.f32 %v517, 1e-05
      %v543 = vadd.f32 %v518, 1e-05
      %v544 = vadd.f32 %v519, 1e-05
      %v545 = vadd.f32 %v520, 1e-05
      %v546 = vadd.f32 %v521, 1e-05
      %v547 = vadd.f32 %v522, 1e-05
      %v548 = vadd.f32 %v523, 1e-05
      %v549 = vadd.f32 %v524, 1e-05
      %v550 = vadd.f32 %v525, 1e-05
      %v551 = vadd.f32 %v526, 1e-05
      %v552 = vadd.f32 %v527, 1e-05
      %v553 = vadd.f32 %v528, 1e-05
      %v554 = vadd.f32 %v529, 1e-05
      %v555 = vadd.f32 %v530, 1e-05
      %v556 = vadd.f32 %v531, 1e-05
      %v557 = vadd.f32 %v532, 1e-05
      %v558 = vadd.f32 %v533, 1e-05
      %v559 = vadd.f32 %v534, 1e-05
      %v560 = vadd.f32 %v535, 1e-05
      %v561 = vadd.f32 %v536, 1e-05
      %v562 = vadd.f32 %v537, 1e-05
      %v563 = vadd.f32 %v538, 1e-05
      %v564 = vrsqrt.pop %v539
      %v565 = vmul.f32 %v564, %v539
      %v566 = vmul.f32 %v565, %v564
      %v567 = vmul.f32 0.5, %v566
      %v568 = vsub.f32 1.5, %v567
      %v569 = vmul.f32 %v564, %v568
      %vm570 = vweird.f32 %v539
      %vm571 = vweird.f32 %v564
      %vm572 = vmor %vm570, %vm571
      %v573 = vsel %vm572, %v564, %v569
      %v574 = vrsqrt.pop %v540
      %v575 = vmul.f32 %v574, %v540
      %v576 = vmul.f32 %v575, %v574
      %v577 = vmul.f32 0.5, %v576
      %v578 = vsub.f32 1.5, %v577
      %v579 = vmul.f32 %v574, %v578
      %vm580 = vweird.f32 %v540
      %vm581 = vweird.f32 %v574
      %vm582 = vmor %vm580, %vm581
      %v583 = vsel %vm582, %v574, %v579
      %v584 = vrsqrt.pop %v541
      %v585 = vmul.f32 %v584, %v541
      %v586 = vmul.f32 %v585, %v584
      %v587 = vmul.f32 0.5, %v586
      %v588 = vsub.f32 1.5, %v587
      %v589 = vmul.f32 %v584, %v588
      %vm590 = vweird.f32 %v541
      %vm591 = vweird.f32 %v584
      %vm592 = vmor %vm590, %vm591
      %v593 = vsel %vm592, %v584, %v589
      %v594 = vrsqrt.pop %v542
      %v595 = vmul.f32 %v594, %v542
      %v596 = vmul.f32 %v595, %v594
      %v597 = vmul.f32 0.5, %v596
      %v598 = vsub.f32 1.5, %v597
      %v599 = vmul.f32 %v594, %v598
      %vm600 = vweird.f32 %v542
      %vm601 = vweird.f32 %v594
      %vm602 = vmor %vm600, %vm601
      %v603 = vsel %vm602, %v594, %v599
      %v604 = vrsqrt.pop %v543
      %v605 = vmul.f32 %v604, %v543
      %v606 = vmul.f32 %v605, %v604
      %v607 = vmul.f32 0.5, %v606
      %v608 = vsub.f32 1.5, %v607
      %v609 = vmul.f32 %v604, %v608
      %vm610 = vweird.f32 %v543
      %vm611 = vweird.f32 %v604
      %vm612 = vmor %vm610, %vm611
      %v613 = vsel %vm612, %v604, %v609
      %v614 = vrsqrt.pop %v544
      %v615 = vmul.f32 %v614, %v544
      %v616 = vmul.f32 %v615, %v614
      %v617 = vmul.f32 0.5, %v616
      %v618 = vsub.f32 1.5, %v617
      %v619 = vmul.f32 %v614, %v618
      %vm620 = vweird.f32 %v544
      %vm621 = vweird.f32 %v614
      %vm622 = vmor %vm620, %vm621
      %v623 = vsel %vm622, %v614, %v619
      %v624 = vrsqrt.pop %v545
      %v625 = vmul.f32 %v624, %v545
      %v626 = vmul.f32 %v625, %v624
      %v627 = vmul.f32 0.5, %v626
      %v628 = vsub.f32 1.5, %v627
      %v629 = vmul.f32 %v624, %v628
      %vm630 = vweird.f32 %v545
      %vm631 = vweird.f32 %v624
      %vm632 = vmor %vm630, %vm631
      %v633 = vsel %vm632, %v624, %v629
      %v634 = vrsqrt.pop %v546
      %v635 = vmul.f32 %v634, %v546
      %v636 = vmul.f32 %v635, %v634
      %v637 = vmul.f32 0.5, %v636
      %v638 = vsub.f32 1.5, %v637
      %v639 = vmul.f32 %v634, %v638
      %vm640 = vweird.f32 %v546
      %vm641 = vweird.f32 %v634
      %vm642 = vmor %vm640, %vm641
      %v643 = vsel %vm642, %v634, %v639
      %v644 = vrsqrt.pop %v547
      %v645 = vmul.f32 %v644, %v547
      %v646 = vmul.f32 %v645, %v644
      %v647 = vmul.f32 0.5, %v646
      %v648 = vsub.f32 1.5, %v647
      %v649 = vmul.f32 %v644, %v648
      %vm650 = vweird.f32 %v547
      %vm651 = vweird.f32 %v644
      %vm652 = vmor %vm650, %vm651
      %v653 = vsel %vm652, %v644, %v649
      %v654 = vrsqrt.pop %v548
      %v655 = vmul.f32 %v654, %v548
      %v656 = vmul.f32 %v655, %v654
      %v657 = vmul.f32 0.5, %v656
      %v658 = vsub.f32 1.5, %v657
      %v659 = vmul.f32 %v654, %v658
      %vm660 = vweird.f32 %v548
      %vm661 = vweird.f32 %v654
      %vm662 = vmor %vm660, %vm661
      %v663 = vsel %vm662, %v654, %v659
      %v664 = vrsqrt.pop %v549
      %v665 = vmul.f32 %v664, %v549
      %v666 = vmul.f32 %v665, %v664
      %v667 = vmul.f32 0.5, %v666
      %v668 = vsub.f32 1.5, %v667
      %v669 = vmul.f32 %v664, %v668
      %vm670 = vweird.f32 %v549
      %vm671 = vweird.f32 %v664
      %vm672 = vmor %vm670, %vm671
      %v673 = vsel %vm672, %v664, %v669
      %v674 = vrsqrt.pop %v550
      %v675 = vmul.f32 %v674, %v550
      %v676 = vmul.f32 %v675, %v674
      %v677 = vmul.f32 0.5, %v676
      %v678 = vsub.f32 1.5, %v677
      %v679 = vmul.f32 %v674, %v678
      %vm680 = vweird.f32 %v550
      %vm681 = vweird.f32 %v674
      %vm682 = vmor %vm680, %vm681
      %v683 = vsel %vm682, %v674, %v679
      %v684 = vrsqrt.pop %v551
      %v685 = vmul.f32 %v684, %v551
      %v686 = vmul.f32 %v685, %v684
      %v687 = vmul.f32 0.5, %v686
      %v688 = vsub.f32 1.5, %v687
      %v689 = vmul.f32 %v684, %v688
      %vm690 = vweird.f32 %v551
      %vm691 = vweird.f32 %v684
      %vm692 = vmor %vm690, %vm691
      %v693 = vsel %vm692, %v684, %v689
      %v694 = vrsqrt.pop %v552
      %v695 = vmul.f32 %v694, %v552
      %v696 = vmul.f32 %v695, %v694
      %v697 = vmul.f32 0.5, %v696
      %v698 = vsub.f32 1.5, %v697
      %v699 = vmul.f32 %v694, %v698
      %vm700 = vweird.f32 %v552
      %vm701 = vweird.f32 %v694
      %vm702 = vmor %vm700, %vm701
      %v703 = vsel %vm702, %v694, %v699
      %v704 = vrsqrt.pop %v553
      %v705 = vmul.f32 %v704, %v553
      %v706 = vmul.f32 %v705, %v704
      %v707 = vmul.f32 0.5, %v706
      %v708 = vsub.f32 1.5, %v707
      %v709 = vmul.f32 %v704, %v708
      %vm710 = vweird.f32 %v553
      %vm711 = vweird.f32 %v704
      %vm712 = vmor %vm710, %vm711
      %v713 = vsel %vm712, %v704, %v709
      %v714 = vrsqrt.pop %v554
      %v715 = vmul.f32 %v714, %v554
      %v716 = vmul.f32 %v715, %v714
      %v717 = vmul.f32 0.5, %v716
      %v718 = vsub.f32 1.5, %v717
      %v719 = vmul.f32 %v714, %v718
      %vm720 = vweird.f32 %v554
      %vm721 = vweird.f32 %v714
      %vm722 = vmor %vm720, %vm721
      %v723 = vsel %vm722, %v714, %v719
      %v724 = vrsqrt.pop %v555
      %v725 = vmul.f32 %v724, %v555
      %v726 = vmul.f32 %v725, %v724
      %v727 = vmul.f32 0.5, %v726
      %v728 = vsub.f32 1.5, %v727
      %v729 = vmul.f32 %v724, %v728
      %vm730 = vweird.f32 %v555
      %vm731 = vweird.f32 %v724
      %vm732 = vmor %vm730, %vm731
      %v733 = vsel %vm732, %v724, %v729
      %v734 = vrsqrt.pop %v556
      %v735 = vmul.f32 %v734, %v556
      %v736 = vmul.f32 %v735, %v734
      %v737 = vmul.f32 0.5, %v736
      %v738 = vsub.f32 1.5, %v737
      %v739 = vmul.f32 %v734, %v738
      %vm740 = vweird.f32 %v556
      %vm741 = vweird.f32 %v734
      %vm742 = vmor %vm740, %vm741
      %v743 = vsel %vm742, %v734, %v739
      %v744 = vrsqrt.pop %v557
      %v745 = vmul.f32 %v744, %v557
      %v746 = vmul.f32 %v745, %v744
      %v747 = vmul.f32 0.5, %v746
      %v748 = vsub.f32 1.5, %v747
      %v749 = vmul.f32 %v744, %v748
      %vm750 = vweird.f32 %v557
      %vm751 = vweird.f32 %v744
      %vm752 = vmor %vm750, %vm751
      %v753 = vsel %vm752, %v744, %v749
      %v754 = vrsqrt.pop %v558
      %v755 = vmul.f32 %v754, %v558
      %v756 = vmul.f32 %v755, %v754
      %v757 = vmul.f32 0.5, %v756
      %v758 = vsub.f32 1.5, %v757
      %v759 = vmul.f32 %v754, %v758
      %vm760 = vweird.f32 %v558
      %vm761 = vweird.f32 %v754
      %vm762 = vmor %vm760, %vm761
      %v763 = vsel %vm762, %v754, %v759
      %v764 = vrsqrt.pop %v559
      %v765 = vmul.f32 %v764, %v559
      %v766 = vmul.f32 %v765, %v764
      %v767 = vmul.f32 0.5, %v766
      %v768 = vsub.f32 1.5, %v767
      %v769 = vmul.f32 %v764, %v768
      %vm770 = vweird.f32 %v559
      %vm771 = vweird.f32 %v764
      %vm772 = vmor %vm770, %vm771
      %v773 = vsel %vm772, %v764, %v769
      %v774 = vrsqrt.pop %v560
      %v775 = vmul.f32 %v774, %v560
      %v776 = vmul.f32 %v775, %v774
      %v777 = vmul.f32 0.5, %v776
      %v778 = vsub.f32 1.5, %v777
      %v779 = vmul.f32 %v774, %v778
      %vm780 = vweird.f32 %v560
      %vm781 = vweird.f32 %v774
      %vm782 = vmor %vm780, %vm781
      %v783 = vsel %vm782, %v774, %v779
      %v784 = vrsqrt.pop %v561
      %v785 = vmul.f32 %v784, %v561
      %v786 = vmul.f32 %v785, %v784
      %v787 = vmul.f32 0.5, %v786
      %v788 = vsub.f32 1.5, %v787
      %v789 = vmul.f32 %v784, %v788
      %vm790 = vweird.f32 %v561
      %vm791 = vweird.f32 %v784
      %vm792 = vmor %vm790, %vm791
      %v793 = vsel %vm792, %v784, %v789
      %v794 = vrsqrt.pop %v562
      %v795 = vmul.f32 %v794, %v562
      %v796 = vmul.f32 %v795, %v794
      %v797 = vmul.f32 0.5, %v796
      %v798 = vsub.f32 1.5, %v797
      %v799 = vmul.f32 %v794, %v798
      %vm800 = vweird.f32 %v562
      %vm801 = vweird.f32 %v794
      %vm802 = vmor %vm800, %vm801
      %v803 = vsel %vm802, %v794, %v799
      %v804 = vrsqrt.pop %v563
      %v805 = vmul.f32 %v804, %v563
      %v806 = vmul.f32 %v805, %v804
      %v807 = vmul.f32 0.5, %v806
      %v808 = vsub.f32 1.5, %v807
      %v809 = vmul.f32 %v804, %v808
      %vm810 = vweird.f32 %v563
      %vm811 = vweird.f32 %v804
      %vm812 = vmor %vm810, %vm811
      %v813 = vsel %vm812, %v804, %v809
      %v814 = vmul.f32 %v414, %v573
      %v815 = vmul.f32 %v415, %v583
      %v816 = vmul.f32 %v416, %v593
      %v817 = vmul.f32 %v417, %v603
      %v818 = vmul.f32 %v418, %v613
      %v819 = vmul.f32 %v419, %v623
      %v820 = vmul.f32 %v420, %v633
      %v821 = vmul.f32 %v421, %v643
      %v822 = vmul.f32 %v422, %v653
      %v823 = vmul.f32 %v423, %v663
      %v824 = vmul.f32 %v424, %v673
      %v825 = vmul.f32 %v425, %v683
      %v826 = vmul.f32 %v426, %v693
      %v827 = vmul.f32 %v427, %v703
      %v828 = vmul.f32 %v428, %v713
      %v829 = vmul.f32 %v429, %v723
      %v830 = vmul.f32 %v430, %v733
      %v831 = vmul.f32 %v431, %v743
      %v832 = vmul.f32 %v432, %v753
      %v833 = vmul.f32 %v433, %v763
      %v834 = vmul.f32 %v434, %v773
      %v835 = vmul.f32 %v435, %v783
      %v836 = vmul.f32 %v436, %v793
      %v837 = vmul.f32 %v437, %v803
      %v838 = vmul.f32 %v438, %v813
      %v839 = vld [vmem:[%s1] sm:$0x1]
      %v841 = vperm.slane %v839, 0
      %v843 = vmul.f32 %v814, %v841
      %v844 = vmul.f32 %v815, %v841
      %v845 = vmul.f32 %v816, %v841
      %v846 = vmul.f32 %v817, %v841
      %v847 = vmul.f32 %v818, %v841
      %v848 = vmul.f32 %v819, %v841
      %v849 = vmul.f32 %v820, %v841
      %v850 = vmul.f32 %v821, %v841
      %v851 = vmul.f32 %v822, %v841
      %v852 = vmul.f32 %v823, %v841
      %v853 = vmul.f32 %v824, %v841
      %v854 = vmul.f32 %v825, %v841
      %v855 = vmul.f32 %v826, %v841
      %v856 = vmul.f32 %v827, %v841
      %v857 = vmul.f32 %v828, %v841
      %v858 = vmul.f32 %v829, %v841
      %v859 = vmul.f32 %v830, %v841
      %v860 = vmul.f32 %v831, %v841
      %v861 = vmul.f32 %v832, %v841
      %v862 = vmul.f32 %v833, %v841
      %v863 = vmul.f32 %v834, %v841
      %v864 = vmul.f32 %v835, %v841
      %v865 = vmul.f32 %v836, %v841
      %v866 = vmul.f32 %v837, %v841
      %v867 = vmul.f32 %v838, %v841
      %v868 = vld [vmem:[%s2] sm:$0x1]
      %v870 = vperm.slane %v868, 0
      %v872 = vadd.f32 %v843, %v870
      %v873 = vadd.f32 %v844, %v870
      %v874 = vadd.f32 %v845, %v870
      %v875 = vadd.f32 %v846, %v870
      %v876 = vadd.f32 %v847, %v870
      %v877 = vadd.f32 %v848, %v870
      %v878 = vadd.f32 %v849, %v870
      %v879 = vadd.f32 %v850, %v870
      %v880 = vadd.f32 %v851, %v870
      %v881 = vadd.f32 %v852, %v870
      %v882 = vadd.f32 %v853, %v870
      %v883 = vadd.f32 %v854, %v870
      %v884 = vadd.f32 %v855, %v870
      %v885 = vadd.f32 %v856, %v870
      %v886 = vadd.f32 %v857, %v870
      %v887 = vadd.f32 %v858, %v870
      %v888 = vadd.f32 %v859, %v870
      %v889 = vadd.f32 %v860, %v870
      %v890 = vadd.f32 %v861, %v870
      %v891 = vadd.f32 %v862, %v870
      %v892 = vadd.f32 %v863, %v870
      %v893 = vadd.f32 %v864, %v870
      %v894 = vadd.f32 %v865, %v870
      %v895 = vadd.f32 %v866, %v870
      %v896 = vadd.f32 %v867, %v870
      %v897 = vpack.c.bf16 %v873, %v872
      %v898 = vpack.c.bf16 %v875, %v874
      %v899 = vpack.c.bf16 %v877, %v876
      %v900 = vpack.c.bf16 %v879, %v878
      %v901 = vpack.c.bf16 %v881, %v880
      %v902 = vpack.c.bf16 %v883, %v882
      %v903 = vpack.c.bf16 %v885, %v884
      %v904 = vpack.c.bf16 %v887, %v886
      %v905 = vpack.c.bf16 %v889, %v888
      %v906 = vpack.c.bf16 %v891, %v890
      %v907 = vpack.c.bf16 %v893, %v892
      %v908 = vpack.c.bf16 %v895, %v894
      %v909 = vpack.c.bf16 %v896, %v896
      %v910 = vld [vmem:[%s3] sm:$0xff]
      %v911 = vld [vmem:[%s3 + $0x8] sm:$0xff]
      %v912 = vld [vmem:[%s3 + $0x10] sm:$0xff]
      %v913 = vld [vmem:[%s3 + $0x18] sm:$0xff]
      %v914 = vld [vmem:[%s3 + $0x20] sm:$0xff]
      %v915 = vld [vmem:[%s3 + $0x28] sm:$0xff]
      %v916 = vld [vmem:[%s3 + $0x30] sm:$0xff]
      %v917 = vld [vmem:[%s3 + $0x38] sm:$0xff]
      %v918 = vld [vmem:[%s3 + $0x40] sm:$0xff]
      %v919 = vld [vmem:[%s3 + $0x48] sm:$0xff]
      %v920 = vld [vmem:[%s3 + $0x50] sm:$0xff]
      %v921 = vld [vmem:[%s3 + $0x58] sm:$0xff]
      %v922 = vld [vmem:[%s3 + $0x60] sm:$0xff]
      %v923 = vld [vmem:[%s3 + $0x68] sm:$0xff]
      %v924 = vld [vmem:[%s3 + $0x70] sm:$0xff]
      %v925 = vld [vmem:[%s3 + $0x78] sm:$0xff]
      %v926 = vld [vmem:[%s3 + $0x80] sm:$0xff]
      %v927 = vld [vmem:[%s3 + $0x88] sm:$0xff]
      %v928 = vld [vmem:[%s3 + $0x90] sm:$0xff]
      %v929 = vld [vmem:[%s3 + $0x98] sm:$0xff]
      %v930 = vld [vmem:[%s3 + $0xa0] sm:$0xff]
      %v931 = vld [vmem:[%s3 + $0xa8] sm:$0xff]
      %v932 = vld [vmem:[%s3 + $0xb0] sm:$0xff]
      %v933 = vld [vmem:[%s3 + $0xb8] sm:$0xff]
      %v934 = vld [vmem:[%s3 + $0xc0] sm:$0xff]
      %v935 = vld [vmem:[%s3 + $0xc8] sm:$0xff]
      %v936 = vld [vmem:[%s3 + $0xd0] sm:$0xff]
      %v937 = vld [vmem:[%s3 + $0xd8] sm:$0xff]
      %v938 = vld [vmem:[%s3 + $0xe0] sm:$0xff]
      %v939 = vld [vmem:[%s3 + $0xe8] sm:$0xff]
      %v940 = vld [vmem:[%s3 + $0xf0] sm:$0xff]
      %v941 = vld [vmem:[%s3 + $0xf8] sm:$0xff]
      %v942 = vld [vmem:[%s4] sm:$0xf]
      %v944 = vperm.slane %v942, 0
      %v945 = vperm.slane %v942, 1
      %v946 = vperm.slane %v942, 2
      %v947 = vperm.slane %v942, 3
      %v984 = vunpack.c.l.b16 %v910
      %v985 = vunpack.c.h.b16 %v910
      %v986 = vunpack.c.l.b16 %v911
      %v987 = vunpack.c.h.b16 %v911
      %v988 = vunpack.c.l.b16 %v912
      %v989 = vunpack.c.h.b16 %v912
      %v990 = vunpack.c.l.b16 %v913
      %v991 = vunpack.c.h.b16 %v913
      %v992 = vunpack.c.l.b16 %v914
      %v993 = vunpack.c.h.b16 %v914
      %v994 = vunpack.c.l.b16 %v915
      %v995 = vunpack.c.h.b16 %v915
      %v996 = vunpack.c.l.b16 %v916
      %v997 = vunpack.c.h.b16 %v916
      %v998 = vunpack.c.l.b16 %v917
      %v999 = vunpack.c.h.b16 %v917
      %v1000 = vunpack.c.l.b16 %v918
      %v1001 = vunpack.c.h.b16 %v918
      %v1002 = vunpack.c.l.b16 %v919
      %v1003 = vunpack.c.h.b16 %v919
      %v1004 = vunpack.c.l.b16 %v920
      %v1005 = vunpack.c.h.b16 %v920
      %v1006 = vunpack.c.l.b16 %v921
      %v1007 = vunpack.c.h.b16 %v921
      %v1008 = vunpack.c.l.b16 %v922
      %v1009 = vunpack.c.h.b16 %v922
      %v1010 = vunpack.c.l.b16 %v923
      %v1011 = vunpack.c.h.b16 %v923
      %v1012 = vunpack.c.l.b16 %v924
      %v1013 = vunpack.c.h.b16 %v924
      %v1014 = vunpack.c.l.b16 %v925
      %v1015 = vunpack.c.h.b16 %v925
      %v1016 = vunpack.c.l.b16 %v926
      %v1017 = vunpack.c.h.b16 %v926
      %v1018 = vunpack.c.l.b16 %v927
      %v1019 = vunpack.c.h.b16 %v927
      %v1020 = vunpack.c.l.b16 %v928
      %v1021 = vunpack.c.h.b16 %v928
      %v1022 = vunpack.c.l.b16 %v929
      %v1023 = vunpack.c.h.b16 %v929
      %v1024 = vunpack.c.l.b16 %v930
      %v1025 = vunpack.c.h.b16 %v930
      %v1026 = vunpack.c.l.b16 %v931
      %v1027 = vunpack.c.h.b16 %v931
      %v1028 = vunpack.c.l.b16 %v932
      %v1029 = vunpack.c.h.b16 %v932
      %v1030 = vunpack.c.l.b16 %v933
      %v1031 = vunpack.c.h.b16 %v933
      %v1032 = vunpack.c.l.b16 %v934
      %v1033 = vunpack.c.h.b16 %v934
      %v1034 = vunpack.c.l.b16 %v935
      %v1035 = vunpack.c.h.b16 %v935
      %v1036 = vunpack.c.l.b16 %v936
      %v1037 = vunpack.c.h.b16 %v936
      %v1038 = vunpack.c.l.b16 %v937
      %v1039 = vunpack.c.h.b16 %v937
      %v1040 = vunpack.c.l.b16 %v938
      %v1041 = vunpack.c.h.b16 %v938
      %v1042 = vunpack.c.l.b16 %v939
      %v1043 = vunpack.c.h.b16 %v939
      %v1044 = vunpack.c.l.b16 %v940
      %v1045 = vunpack.c.h.b16 %v940
      %v1046 = vunpack.c.l.b16 %v941
      %v1047 = vunpack.c.h.b16 %v941
      %v1048 = vpack.c.b16 %v988, %v984
      %v1049 = vpack.c.b16 %v989, %v985
      %v1050 = vpack.c.b16 %v990, %v986
      %v1051 = vpack.c.b16 %v991, %v987
      %v1052 = vpack.c.b16 %v996, %v992
      %v1053 = vpack.c.b16 %v997, %v993
      %v1054 = vpack.c.b16 %v998, %v994
      %v1055 = vpack.c.b16 %v999, %v995
      %v1056 = vpack.c.b16 %v1004, %v1000
      %v1057 = vpack.c.b16 %v1005, %v1001
      %v1058 = vpack.c.b16 %v1006, %v1002
      %v1059 = vpack.c.b16 %v1007, %v1003
      %v1060 = vpack.c.b16 %v1012, %v1008
      %v1061 = vpack.c.b16 %v1013, %v1009
      %v1062 = vpack.c.b16 %v1014, %v1010
      %v1063 = vpack.c.b16 %v1015, %v1011
      %v1064 = vpack.c.b16 %v1020, %v1016
      %v1065 = vpack.c.b16 %v1021, %v1017
      %v1066 = vpack.c.b16 %v1022, %v1018
      %v1067 = vpack.c.b16 %v1023, %v1019
      %v1068 = vpack.c.b16 %v1028, %v1024
      %v1069 = vpack.c.b16 %v1029, %v1025
      %v1070 = vpack.c.b16 %v1030, %v1026
      %v1071 = vpack.c.b16 %v1031, %v1027
      %v1072 = vpack.c.b16 %v1036, %v1032
      %v1073 = vpack.c.b16 %v1037, %v1033
      %v1074 = vpack.c.b16 %v1038, %v1034
      %v1075 = vpack.c.b16 %v1039, %v1035
      %v1076 = vpack.c.b16 %v1044, %v1040
      %v1077 = vpack.c.b16 %v1045, %v1041
      %v1078 = vpack.c.b16 %v1046, %v1042
      %v1079 = vpack.c.b16 %v1047, %v1043
      %1112 = vmatpush.bf16.msra.mxu0 %v1076
      %1113 = vmatpush.bf16.msra.mxu0 %v1072
      %1114 = vmatpush.bf16.msra.mxu0 %v1068
      %1115 = vmatpush.bf16.msra.mxu0 %v1064
      %1116 = vmatpush.bf16.msra.mxu0 %v1060
      %1117 = vmatpush.bf16.msra.mxu0 %v1056
      %1118 = vmatpush.bf16.msra.mxu0 %v1052
      %1119 = vmatpush.bf16.msra.mxu0 %v1048
      %1120 = vmatmul.bf16.gmra.mxu0 %v897
      %v1121 = vpop.f32.mrf.mxu0
      %v1122 = vadd.f32 %v944, %v1121
      %v1123 = vpop.f32.mrf.mxu0
      %v1124 = vadd.f32 %v944, %v1123
      %1125 = vmatmul.bf16.gmra.mxu0 %v898
      %v1126 = vpop.f32.mrf.mxu0
      %v1127 = vadd.f32 %v944, %v1126
      %v1128 = vpop.f32.mrf.mxu0
      %v1129 = vadd.f32 %v944, %v1128
      %1130 = vmatmul.bf16.gmra.mxu0 %v899
      %v1131 = vpop.f32.mrf.mxu0
      %v1132 = vadd.f32 %v944, %v1131
      %v1133 = vpop.f32.mrf.mxu0
      %v1134 = vadd.f32 %v944, %v1133
      %1135 = vmatmul.bf16.gmra.mxu0 %v900
      %v1136 = vpop.f32.mrf.mxu0
      %v1137 = vadd.f32 %v944, %v1136
      %v1138 = vpop.f32.mrf.mxu0
      %v1139 = vadd.f32 %v944, %v1138
      %1140 = vmatmul.bf16.gmra.mxu0 %v901
      %v1141 = vpop.f32.mrf.mxu0
      %v1142 = vadd.f32 %v944, %v1141
      %v1143 = vpop.f32.mrf.mxu0
      %v1144 = vadd.f32 %v944, %v1143
      %1145 = vmatmul.bf16.gmra.mxu0 %v902
      %v1146 = vpop.f32.mrf.mxu0
      %v1147 = vadd.f32 %v944, %v1146
      %v1148 = vpop.f32.mrf.mxu0
      %v1149 = vadd.f32 %v944, %v1148
      %1150 = vmatmul.bf16.gmra.mxu0 %v903
      %v1151 = vpop.f32.mrf.mxu0
      %v1152 = vadd.f32 %v944, %v1151
      %v1153 = vpop.f32.mrf.mxu0
      %v1154 = vadd.f32 %v944, %v1153
      %1155 = vmatmul.bf16.gmra.mxu0 %v904
      %v1156 = vpop.f32.mrf.mxu0
      %v1157 = vadd.f32 %v944, %v1156
      %v1158 = vpop.f32.mrf.mxu0
      %v1159 = vadd.f32 %v944, %v1158
      %1160 = vmatmul.bf16.gmra.mxu0 %v905
      %v1161 = vpop.f32.mrf.mxu0
      %v1162 = vadd.f32 %v944, %v1161
      %v1163 = vpop.f32.mrf.mxu0
      %v1164 = vadd.f32 %v944, %v1163
      %1165 = vmatmul.bf16.gmra.mxu0 %v906
      %v1166 = vpop.f32.mrf.mxu0
      %v1167 = vadd.f32 %v944, %v1166
      %v1168 = vpop.f32.mrf.mxu0
      %v1169 = vadd.f32 %v944, %v1168
      %1170 = vmatmul.bf16.gmra.mxu0 %v907
      %v1171 = vpop.f32.mrf.mxu0
      %v1172 = vadd.f32 %v944, %v1171
      %v1173 = vpop.f32.mrf.mxu0
      %v1174 = vadd.f32 %v944, %v1173
      %1175 = vmatmul.bf16.gmra.mxu0 %v908
      %v1176 = vpop.f32.mrf.mxu0
      %v1177 = vadd.f32 %v944, %v1176
      %v1178 = vpop.f32.mrf.mxu0
      %v1179 = vadd.f32 %v944, %v1178
      %1180 = vmatmul.bf16.gmra.mxu0 %v909
      %v1181 = vpop.f32.mrf.mxu0
      %v1182 = vadd.f32 %v944, %v1181
      %v1183 = vpop.f32.mrf.mxu0
      %1184 = vdwg.mxu0
      %1185 = vmatpush.bf16.msra.mxu0 %v1077
      %1186 = vmatpush.bf16.msra.mxu0 %v1073
      %1187 = vmatpush.bf16.msra.mxu0 %v1069
      %1188 = vmatpush.bf16.msra.mxu0 %v1065
      %1189 = vmatpush.bf16.msra.mxu0 %v1061
      %1190 = vmatpush.bf16.msra.mxu0 %v1057
      %1191 = vmatpush.bf16.msra.mxu0 %v1053
      %1192 = vmatpush.bf16.msra.mxu0 %v1049
      %1193 = vmatmul.bf16.gmra.mxu0 %v897
      %v1194 = vpop.f32.mrf.mxu0
      %v1195 = vadd.f32 %v945, %v1194
      %v1196 = vpop.f32.mrf.mxu0
      %v1197 = vadd.f32 %v945, %v1196
      %1198 = vmatmul.bf16.gmra.mxu0 %v898
      %v1199 = vpop.f32.mrf.mxu0
      %v1200 = vadd.f32 %v945, %v1199
      %v1201 = vpop.f32.mrf.mxu0
      %v1202 = vadd.f32 %v945, %v1201
      %1203 = vmatmul.bf16.gmra.mxu0 %v899
      %v1204 = vpop.f32.mrf.mxu0
      %v1205 = vadd.f32 %v945, %v1204
      %v1206 = vpop.f32.mrf.mxu0
      %v1207 = vadd.f32 %v945, %v1206
      %1208 = vmatmul.bf16.gmra.mxu0 %v900
      %v1209 = vpop.f32.mrf.mxu0
      %v1210 = vadd.f32 %v945, %v1209
      %v1211 = vpop.f32.mrf.mxu0
      %v1212 = vadd.f32 %v945, %v1211
      %1213 = vmatmul.bf16.gmra.mxu0 %v901
      %v1214 = vpop.f32.mrf.mxu0
      %v1215 = vadd.f32 %v945, %v1214
      %v1216 = vpop.f32.mrf.mxu0
      %v1217 = vadd.f32 %v945, %v1216
      %1218 = vmatmul.bf16.gmra.mxu0 %v902
      %v1219 = vpop.f32.mrf.mxu0
      %v1220 = vadd.f32 %v945, %v1219
      %v1221 = vpop.f32.mrf.mxu0
      %v1222 = vadd.f32 %v945, %v1221
      %1223 = vmatmul.bf16.gmra.mxu0 %v903
      %v1224 = vpop.f32.mrf.mxu0
      %v1225 = vadd.f32 %v945, %v1224
      %v1226 = vpop.f32.mrf.mxu0
      %v1227 = vadd.f32 %v945, %v1226
      %1228 = vmatmul.bf16.gmra.mxu0 %v904
      %v1229 = vpop.f32.mrf.mxu0
      %v1230 = vadd.f32 %v945, %v1229
      %v1231 = vpop.f32.mrf.mxu0
      %v1232 = vadd.f32 %v945, %v1231
      %1233 = vmatmul.bf16.gmra.mxu0 %v905
      %v1234 = vpop.f32.mrf.mxu0
      %v1235 = vadd.f32 %v945, %v1234
      %v1236 = vpop.f32.mrf.mxu0
      %v1237 = vadd.f32 %v945, %v1236
      %1238 = vmatmul.bf16.gmra.mxu0 %v906
      %v1239 = vpop.f32.mrf.mxu0
      %v1240 = vadd.f32 %v945, %v1239
      %v1241 = vpop.f32.mrf.mxu0
      %v1242 = vadd.f32 %v945, %v1241
      %1243 = vmatmul.bf16.gmra.mxu0 %v907
      %v1244 = vpop.f32.mrf.mxu0
      %v1245 = vadd.f32 %v945, %v1244
      %v1246 = vpop.f32.mrf.mxu0
      %v1247 = vadd.f32 %v945, %v1246
      %1248 = vmatmul.bf16.gmra.mxu0 %v908
      %v1249 = vpop.f32.mrf.mxu0
      %v1250 = vadd.f32 %v945, %v1249
      %v1251 = vpop.f32.mrf.mxu0
      %v1252 = vadd.f32 %v945, %v1251
      %1253 = vmatmul.bf16.gmra.mxu0 %v909
      %v1254 = vpop.f32.mrf.mxu0
      %v1255 = vadd.f32 %v945, %v1254
      %v1256 = vpop.f32.mrf.mxu0
      %1257 = vdwg.mxu0
      %1258 = vmatpush.bf16.msra.mxu0 %v1078
      %1259 = vmatpush.bf16.msra.mxu0 %v1074
      %1260 = vmatpush.bf16.msra.mxu0 %v1070
      %1261 = vmatpush.bf16.msra.mxu0 %v1066
      %1262 = vmatpush.bf16.msra.mxu0 %v1062
      %1263 = vmatpush.bf16.msra.mxu0 %v1058
      %1264 = vmatpush.bf16.msra.mxu0 %v1054
      %1265 = vmatpush.bf16.msra.mxu0 %v1050
      %1266 = vmatmul.bf16.gmra.mxu0 %v897
      %v1267 = vpop.f32.mrf.mxu0
      %v1268 = vadd.f32 %v946, %v1267
      %v1269 = vpop.f32.mrf.mxu0
      %v1270 = vadd.f32 %v946, %v1269
      %1271 = vmatmul.bf16.gmra.mxu0 %v898
      %v1272 = vpop.f32.mrf.mxu0
      %v1273 = vadd.f32 %v946, %v1272
      %v1274 = vpop.f32.mrf.mxu0
      %v1275 = vadd.f32 %v946, %v1274
      %1276 = vmatmul.bf16.gmra.mxu0 %v899
      %v1277 = vpop.f32.mrf.mxu0
      %v1278 = vadd.f32 %v946, %v1277
      %v1279 = vpop.f32.mrf.mxu0
      %v1280 = vadd.f32 %v946, %v1279
      %1281 = vmatmul.bf16.gmra.mxu0 %v900
      %v1282 = vpop.f32.mrf.mxu0
      %v1283 = vadd.f32 %v946, %v1282
      %v1284 = vpop.f32.mrf.mxu0
      %v1285 = vadd.f32 %v946, %v1284
      %1286 = vmatmul.bf16.gmra.mxu0 %v901
      %v1287 = vpop.f32.mrf.mxu0
      %v1288 = vadd.f32 %v946, %v1287
      %v1289 = vpop.f32.mrf.mxu0
      %v1290 = vadd.f32 %v946, %v1289
      %1291 = vmatmul.bf16.gmra.mxu0 %v902
      %v1292 = vpop.f32.mrf.mxu0
      %v1293 = vadd.f32 %v946, %v1292
      %v1294 = vpop.f32.mrf.mxu0
      %v1295 = vadd.f32 %v946, %v1294
      %1296 = vmatmul.bf16.gmra.mxu0 %v903
      %v1297 = vpop.f32.mrf.mxu0
      %v1298 = vadd.f32 %v946, %v1297
      %v1299 = vpop.f32.mrf.mxu0
      %v1300 = vadd.f32 %v946, %v1299
      %1301 = vmatmul.bf16.gmra.mxu0 %v904
      %v1302 = vpop.f32.mrf.mxu0
      %v1303 = vadd.f32 %v946, %v1302
      %v1304 = vpop.f32.mrf.mxu0
      %v1305 = vadd.f32 %v946, %v1304
      %1306 = vmatmul.bf16.gmra.mxu0 %v905
      %v1307 = vpop.f32.mrf.mxu0
      %v1308 = vadd.f32 %v946, %v1307
      %v1309 = vpop.f32.mrf.mxu0
      %v1310 = vadd.f32 %v946, %v1309
      %1311 = vmatmul.bf16.gmra.mxu0 %v906
      %v1312 = vpop.f32.mrf.mxu0
      %v1313 = vadd.f32 %v946, %v1312
      %v1314 = vpop.f32.mrf.mxu0
      %v1315 = vadd.f32 %v946, %v1314
      %1316 = vmatmul.bf16.gmra.mxu0 %v907
      %v1317 = vpop.f32.mrf.mxu0
      %v1318 = vadd.f32 %v946, %v1317
      %v1319 = vpop.f32.mrf.mxu0
      %v1320 = vadd.f32 %v946, %v1319
      %1321 = vmatmul.bf16.gmra.mxu0 %v908
      %v1322 = vpop.f32.mrf.mxu0
      %v1323 = vadd.f32 %v946, %v1322
      %v1324 = vpop.f32.mrf.mxu0
      %v1325 = vadd.f32 %v946, %v1324
      %1326 = vmatmul.bf16.gmra.mxu0 %v909
      %v1327 = vpop.f32.mrf.mxu0
      %v1328 = vadd.f32 %v946, %v1327
      %v1329 = vpop.f32.mrf.mxu0
      %1330 = vdwg.mxu0
      %1331 = vmatpush.bf16.msra.mxu0 %v1079
      %1332 = vmatpush.bf16.msra.mxu0 %v1075
      %1333 = vmatpush.bf16.msra.mxu0 %v1071
      %1334 = vmatpush.bf16.msra.mxu0 %v1067
      %1335 = vmatpush.bf16.msra.mxu0 %v1063
      %1336 = vmatpush.bf16.msra.mxu0 %v1059
      %1337 = vmatpush.bf16.msra.mxu0 %v1055
      %1338 = vmatpush.bf16.msra.mxu0 %v1051
      %1339 = vmatmul.bf16.gmra.mxu0 %v897
      %v1340 = vpop.f32.mrf.mxu0
      %v1341 = vadd.f32 %v947, %v1340
      %v1342 = vpop.f32.mrf.mxu0
      %v1343 = vadd.f32 %v947, %v1342
      %1344 = vmatmul.bf16.gmra.mxu0 %v898
      %v1345 = vpop.f32.mrf.mxu0
      %v1346 = vadd.f32 %v947, %v1345
      %v1347 = vpop.f32.mrf.mxu0
      %v1348 = vadd.f32 %v947, %v1347
      %1349 = vmatmul.bf16.gmra.mxu0 %v899
      %v1350 = vpop.f32.mrf.mxu0
      %v1351 = vadd.f32 %v947, %v1350
      %v1352 = vpop.f32.mrf.mxu0
      %v1353 = vadd.f32 %v947, %v1352
      %1354 = vmatmul.bf16.gmra.mxu0 %v900
      %v1355 = vpop.f32.mrf.mxu0
      %v1356 = vadd.f32 %v947, %v1355
      %v1357 = vpop.f32.mrf.mxu0
      %v1358 = vadd.f32 %v947, %v1357
      %1359 = vmatmul.bf16.gmra.mxu0 %v901
      %v1360 = vpop.f32.mrf.mxu0
      %v1361 = vadd.f32 %v947, %v1360
      %v1362 = vpop.f32.mrf.mxu0
      %v1363 = vadd.f32 %v947, %v1362
      %1364 = vmatmul.bf16.gmra.mxu0 %v902
      %v1365 = vpop.f32.mrf.mxu0
      %v1366 = vadd.f32 %v947, %v1365
      %v1367 = vpop.f32.mrf.mxu0
      %v1368 = vadd.f32 %v947, %v1367
      %1369 = vmatmul.bf16.gmra.mxu0 %v903
      %v1370 = vpop.f32.mrf.mxu0
      %v1371 = vadd.f32 %v947, %v1370
      %v1372 = vpop.f32.mrf.mxu0
      %v1373 = vadd.f32 %v947, %v1372
      %1374 = vmatmul.bf16.gmra.mxu0 %v904
      %v1375 = vpop.f32.mrf.mxu0
      %v1376 = vadd.f32 %v947, %v1375
      %v1377 = vpop.f32.mrf.mxu0
      %v1378 = vadd.f32 %v947, %v1377
      %1379 = vmatmul.bf16.gmra.mxu0 %v905
      %v1380 = vpop.f32.mrf.mxu0
      %v1381 = vadd.f32 %v947, %v1380
      %v1382 = vpop.f32.mrf.mxu0
      %v1383 = vadd.f32 %v947, %v1382
      %1384 = vmatmul.bf16.gmra.mxu0 %v906
      %v1385 = vpop.f32.mrf.mxu0
      %v1386 = vadd.f32 %v947, %v1385
      %v1387 = vpop.f32.mrf.mxu0
      %v1388 = vadd.f32 %v947, %v1387
      %1389 = vmatmul.bf16.gmra.mxu0 %v907
      %v1390 = vpop.f32.mrf.mxu0
      %v1391 = vadd.f32 %v947, %v1390
      %v1392 = vpop.f32.mrf.mxu0
      %v1393 = vadd.f32 %v947, %v1392
      %1394 = vmatmul.bf16.gmra.mxu0 %v908
      %v1395 = vpop.f32.mrf.mxu0
      %v1396 = vadd.f32 %v947, %v1395
      %v1397 = vpop.f32.mrf.mxu0
      %v1398 = vadd.f32 %v947, %v1397
      %1399 = vmatmul.bf16.gmra.mxu0 %v909
      %v1400 = vpop.f32.mrf.mxu0
      %v1401 = vadd.f32 %v947, %v1400
      %v1402 = vpop.f32.mrf.mxu0
      %1403 = vdwg.mxu0
      %v1404 = vmul.f32 %v1122, %v1122
      %v1405 = vmul.f32 %v1195, %v1195
      %v1406 = vmul.f32 %v1268, %v1268
      %v1407 = vmul.f32 %v1341, %v1341
      %v1408 = vmul.f32 %v1124, %v1124
      %v1409 = vmul.f32 %v1197, %v1197
      %v1410 = vmul.f32 %v1270, %v1270
      %v1411 = vmul.f32 %v1343, %v1343
      %v1412 = vmul.f32 %v1127, %v1127
      %v1413 = vmul.f32 %v1200, %v1200
      %v1414 = vmul.f32 %v1273, %v1273
      %v1415 = vmul.f32 %v1346, %v1346
      %v1416 = vmul.f32 %v1129, %v1129
      %v1417 = vmul.f32 %v1202, %v1202
      %v1418 = vmul.f32 %v1275, %v1275
      %v1419 = vmul.f32 %v1348, %v1348
      %v1420 = vmul.f32 %v1132, %v1132
      %v1421 = vmul.f32 %v1205, %v1205
      %v1422 = vmul.f32 %v1278, %v1278
      %v1423 = vmul.f32 %v1351, %v1351
      %v1424 = vmul.f32 %v1134, %v1134
      %v1425 = vmul.f32 %v1207, %v1207
      %v1426 = vmul.f32 %v1280, %v1280
      %v1427 = vmul.f32 %v1353, %v1353
      %v1428 = vmul.f32 %v1137, %v1137
      %v1429 = vmul.f32 %v1210, %v1210
      %v1430 = vmul.f32 %v1283, %v1283
      %v1431 = vmul.f32 %v1356, %v1356
      %v1432 = vmul.f32 %v1139, %v1139
      %v1433 = vmul.f32 %v1212, %v1212
      %v1434 = vmul.f32 %v1285, %v1285
      %v1435 = vmul.f32 %v1358, %v1358
      %v1436 = vmul.f32 %v1142, %v1142
      %v1437 = vmul.f32 %v1215, %v1215
      %v1438 = vmul.f32 %v1288, %v1288
      %v1439 = vmul.f32 %v1361, %v1361
      %v1440 = vmul.f32 %v1144, %v1144
      %v1441 = vmul.f32 %v1217, %v1217
      %v1442 = vmul.f32 %v1290, %v1290
      %v1443 = vmul.f32 %v1363, %v1363
      %v1444 = vmul.f32 %v1147, %v1147
      %v1445 = vmul.f32 %v1220, %v1220
      %v1446 = vmul.f32 %v1293, %v1293
      %v1447 = vmul.f32 %v1366, %v1366
      %v1448 = vmul.f32 %v1149, %v1149
      %v1449 = vmul.f32 %v1222, %v1222
      %v1450 = vmul.f32 %v1295, %v1295
      %v1451 = vmul.f32 %v1368, %v1368
      %v1452 = vmul.f32 %v1152, %v1152
      %v1453 = vmul.f32 %v1225, %v1225
      %v1454 = vmul.f32 %v1298, %v1298
      %v1455 = vmul.f32 %v1371, %v1371
      %v1456 = vmul.f32 %v1154, %v1154
      %v1457 = vmul.f32 %v1227, %v1227
      %v1458 = vmul.f32 %v1300, %v1300
      %v1459 = vmul.f32 %v1373, %v1373
      %v1460 = vmul.f32 %v1157, %v1157
      %v1461 = vmul.f32 %v1230, %v1230
      %v1462 = vmul.f32 %v1303, %v1303
      %v1463 = vmul.f32 %v1376, %v1376
      %v1464 = vmul.f32 %v1159, %v1159
      %v1465 = vmul.f32 %v1232, %v1232
      %v1466 = vmul.f32 %v1305, %v1305
      %v1467 = vmul.f32 %v1378, %v1378
      %v1468 = vmul.f32 %v1162, %v1162
      %v1469 = vmul.f32 %v1235, %v1235
      %v1470 = vmul.f32 %v1308, %v1308
      %v1471 = vmul.f32 %v1381, %v1381
      %v1472 = vmul.f32 %v1164, %v1164
      %v1473 = vmul.f32 %v1237, %v1237
      %v1474 = vmul.f32 %v1310, %v1310
      %v1475 = vmul.f32 %v1383, %v1383
      %v1476 = vmul.f32 %v1167, %v1167
      %v1477 = vmul.f32 %v1240, %v1240
      %v1478 = vmul.f32 %v1313, %v1313
      %v1479 = vmul.f32 %v1386, %v1386
      %v1480 = vmul.f32 %v1169, %v1169
      %v1481 = vmul.f32 %v1242, %v1242
      %v1482 = vmul.f32 %v1315, %v1315
      %v1483 = vmul.f32 %v1388, %v1388
      %v1484 = vmul.f32 %v1172, %v1172
      %v1485 = vmul.f32 %v1245, %v1245
      %v1486 = vmul.f32 %v1318, %v1318
      %v1487 = vmul.f32 %v1391, %v1391
      %v1488 = vmul.f32 %v1174, %v1174
      %v1489 = vmul.f32 %v1247, %v1247
      %v1490 = vmul.f32 %v1320, %v1320
      %v1491 = vmul.f32 %v1393, %v1393
      %v1492 = vmul.f32 %v1177, %v1177
      %v1493 = vmul.f32 %v1250, %v1250
      %v1494 = vmul.f32 %v1323, %v1323
      %v1495 = vmul.f32 %v1396, %v1396
      %v1496 = vmul.f32 %v1179, %v1179
      %v1497 = vmul.f32 %v1252, %v1252
      %v1498 = vmul.f32 %v1325, %v1325
      %v1499 = vmul.f32 %v1398, %v1398
      %v1500 = vmul.f32 %v1182, %v1182
      %v1501 = vmul.f32 %v1255, %v1255
      %v1502 = vmul.f32 %v1328, %v1328
      %v1503 = vmul.f32 %v1401, %v1401
      %v1504 = vmul.f32 %v1122, %v1404
      %v1505 = vmul.f32 %v1195, %v1405
      %v1506 = vmul.f32 %v1268, %v1406
      %v1507 = vmul.f32 %v1341, %v1407
      %v1508 = vmul.f32 %v1124, %v1408
      %v1509 = vmul.f32 %v1197, %v1409
      %v1510 = vmul.f32 %v1270, %v1410
      %v1511 = vmul.f32 %v1343, %v1411
      %v1512 = vmul.f32 %v1127, %v1412
      %v1513 = vmul.f32 %v1200, %v1413
      %v1514 = vmul.f32 %v1273, %v1414
      %v1515 = vmul.f32 %v1346, %v1415
      %v1516 = vmul.f32 %v1129, %v1416
      %v1517 = vmul.f32 %v1202, %v1417
      %v1518 = vmul.f32 %v1275, %v1418
      %v1519 = vmul.f32 %v1348, %v1419
      %v1520 = vmul.f32 %v1132, %v1420
      %v1521 = vmul.f32 %v1205, %v1421
      %v1522 = vmul.f32 %v1278, %v1422
      %v1523 = vmul.f32 %v1351, %v1423
      %v1524 = vmul.f32 %v1134, %v1424
      %v1525 = vmul.f32 %v1207, %v1425
      %v1526 = vmul.f32 %v1280, %v1426
      %v1527 = vmul.f32 %v1353, %v1427
      %v1528 = vmul.f32 %v1137, %v1428
      %v1529 = vmul.f32 %v1210, %v1429
      %v1530 = vmul.f32 %v1283, %v1430
      %v1531 = vmul.f32 %v1356, %v1431
      %v1532 = vmul.f32 %v1139, %v1432
      %v1533 = vmul.f32 %v1212, %v1433
      %v1534 = vmul.f32 %v1285, %v1434
      %v1535 = vmul.f32 %v1358, %v1435
      %v1536 = vmul.f32 %v1142, %v1436
      %v1537 = vmul.f32 %v1215, %v1437
      %v1538 = vmul.f32 %v1288, %v1438
      %v1539 = vmul.f32 %v1361, %v1439
      %v1540 = vmul.f32 %v1144, %v1440
      %v1541 = vmul.f32 %v1217, %v1441
      %v1542 = vmul.f32 %v1290, %v1442
      %v1543 = vmul.f32 %v1363, %v1443
      %v1544 = vmul.f32 %v1147, %v1444
      %v1545 = vmul.f32 %v1220, %v1445
      %v1546 = vmul.f32 %v1293, %v1446
      %v1547 = vmul.f32 %v1366, %v1447
      %v1548 = vmul.f32 %v1149, %v1448
      %v1549 = vmul.f32 %v1222, %v1449
      %v1550 = vmul.f32 %v1295, %v1450
      %v1551 = vmul.f32 %v1368, %v1451
      %v1552 = vmul.f32 %v1152, %v1452
      %v1553 = vmul.f32 %v1225, %v1453
      %v1554 = vmul.f32 %v1298, %v1454
      %v1555 = vmul.f32 %v1371, %v1455
      %v1556 = vmul.f32 %v1154, %v1456
      %v1557 = vmul.f32 %v1227, %v1457
      %v1558 = vmul.f32 %v1300, %v1458
      %v1559 = vmul.f32 %v1373, %v1459
      %v1560 = vmul.f32 %v1157, %v1460
      %v1561 = vmul.f32 %v1230, %v1461
      %v1562 = vmul.f32 %v1303, %v1462
      %v1563 = vmul.f32 %v1376, %v1463
      %v1564 = vmul.f32 %v1159, %v1464
      %v1565 = vmul.f32 %v1232, %v1465
      %v1566 = vmul.f32 %v1305, %v1466
      %v1567 = vmul.f32 %v1378, %v1467
      %v1568 = vmul.f32 %v1162, %v1468
      %v1569 = vmul.f32 %v1235, %v1469
      %v1570 = vmul.f32 %v1308, %v1470
      %v1571 = vmul.f32 %v1381, %v1471
      %v1572 = vmul.f32 %v1164, %v1472
      %v1573 = vmul.f32 %v1237, %v1473
      %v1574 = vmul.f32 %v1310, %v1474
      %v1575 = vmul.f32 %v1383, %v1475
      %v1576 = vmul.f32 %v1167, %v1476
      %v1577 = vmul.f32 %v1240, %v1477
      %v1578 = vmul.f32 %v1313, %v1478
      %v1579 = vmul.f32 %v1386, %v1479
      %v1580 = vmul.f32 %v1169, %v1480
      %v1581 = vmul.f32 %v1242, %v1481
      %v1582 = vmul.f32 %v1315, %v1482
      %v1583 = vmul.f32 %v1388, %v1483
      %v1584 = vmul.f32 %v1172, %v1484
      %v1585 = vmul.f32 %v1245, %v1485
      %v1586 = vmul.f32 %v1318, %v1486
      %v1587 = vmul.f32 %v1391, %v1487
      %v1588 = vmul.f32 %v1174, %v1488
      %v1589 = vmul.f32 %v1247, %v1489
      %v1590 = vmul.f32 %v1320, %v1490
      %v1591 = vmul.f32 %v1393, %v1491
      %v1592 = vmul.f32 %v1177, %v1492
      %v1593 = vmul.f32 %v1250, %v1493
      %v1594 = vmul.f32 %v1323, %v1494
      %v1595 = vmul.f32 %v1396, %v1495
      %v1596 = vmul.f32 %v1179, %v1496
      %v1597 = vmul.f32 %v1252, %v1497
      %v1598 = vmul.f32 %v1325, %v1498
      %v1599 = vmul.f32 %v1398, %v1499
      %v1600 = vmul.f32 %v1182, %v1500
      %v1601 = vmul.f32 %v1255, %v1501
      %v1602 = vmul.f32 %v1328, %v1502
      %v1603 = vmul.f32 %v1401, %v1503
      %v1604 = vmul.f32 %v1504, 0.044715
      %v1605 = vmul.f32 %v1505, 0.044715
      %v1606 = vmul.f32 %v1506, 0.044715
      %v1607 = vmul.f32 %v1507, 0.044715
      %v1608 = vmul.f32 %v1508, 0.044715
      %v1609 = vmul.f32 %v1509, 0.044715
      %v1610 = vmul.f32 %v1510, 0.044715
      %v1611 = vmul.f32 %v1511, 0.044715
      %v1612 = vmul.f32 %v1512, 0.044715
      %v1613 = vmul.f32 %v1513, 0.044715
      %v1614 = vmul.f32 %v1514, 0.044715
      %v1615 = vmul.f32 %v1515, 0.044715
      %v1616 = vmul.f32 %v1516, 0.044715
      %v1617 = vmul.f32 %v1517, 0.044715
      %v1618 = vmul.f32 %v1518, 0.044715
      %v1619 = vmul.f32 %v1519, 0.044715
      %v1620 = vmul.f32 %v1520, 0.044715
      %v1621 = vmul.f32 %v1521, 0.044715
      %v1622 = vmul.f32 %v1522, 0.044715
      %v1623 = vmul.f32 %v1523, 0.044715
      %v1624 = vmul.f32 %v1524, 0.044715
      %v1625 = vmul.f32 %v1525, 0.044715
      %v1626 = vmul.f32 %v1526, 0.044715
      %v1627 = vmul.f32 %v1527, 0.044715
      %v1628 = vmul.f32 %v1528, 0.044715
      %v1629 = vmul.f32 %v1529, 0.044715
      %v1630 = vmul.f32 %v1530, 0.044715
      %v1631 = vmul.f32 %v1531, 0.044715
      %v1632 = vmul.f32 %v1532, 0.044715
      %v1633 = vmul.f32 %v1533, 0.044715
      %v1634 = vmul.f32 %v1534, 0.044715
      %v1635 = vmul.f32 %v1535, 0.044715
      %v1636 = vmul.f32 %v1536, 0.044715
      %v1637 = vmul.f32 %v1537, 0.044715
      %v1638 = vmul.f32 %v1538, 0.044715
      %v1639 = vmul.f32 %v1539, 0.044715
      %v1640 = vmul.f32 %v1540, 0.044715
      %v1641 = vmul.f32 %v1541, 0.044715
      %v1642 = vmul.f32 %v1542, 0.044715
      %v1643 = vmul.f32 %v1543, 0.044715
      %v1644 = vmul.f32 %v1544, 0.044715
      %v1645 = vmul.f32 %v1545, 0.044715
      %v1646 = vmul.f32 %v1546, 0.044715
      %v1647 = vmul.f32 %v1547, 0.044715
      %v1648 = vmul.f32 %v1548, 0.044715
      %v1649 = vmul.f32 %v1549, 0.044715
      %v1650 = vmul.f32 %v1550, 0.044715
      %v1651 = vmul.f32 %v1551, 0.044715
      %v1652 = vmul.f32 %v1552, 0.044715
      %v1653 = vmul.f32 %v1553, 0.044715
      %v1654 = vmul.f32 %v1554, 0.044715
      %v1655 = vmul.f32 %v1555, 0.044715
      %v1656 = vmul.f32 %v1556, 0.044715
      %v1657 = vmul.f32 %v1557, 0.044715
      %v1658 = vmul.f32 %v1558, 0.044715
      %v1659 = vmul.f32 %v1559, 0.044715
      %v1660 = vmul.f32 %v1560, 0.044715
      %v1661 = vmul.f32 %v1561, 0.044715
      %v1662 = vmul.f32 %v1562, 0.044715
      %v1663 = vmul.f32 %v1563, 0.044715
      %v1664 = vmul.f32 %v1564, 0.044715
      %v1665 = vmul.f32 %v1565, 0.044715
      %v1666 = vmul.f32 %v1566, 0.044715
      %v1667 = vmul.f32 %v1567, 0.044715
      %v1668 = vmul.f32 %v1568, 0.044715
      %v1669 = vmul.f32 %v1569, 0.044715
      %v1670 = vmul.f32 %v1570, 0.044715
      %v1671 = vmul.f32 %v1571, 0.044715
      %v1672 = vmul.f32 %v1572, 0.044715
      %v1673 = vmul.f32 %v1573, 0.044715
      %v1674 = vmul.f32 %v1574, 0.044715
      %v1675 = vmul.f32 %v1575, 0.044715
      %v1676 = vmul.f32 %v1576, 0.044715
      %v1677 = vmul.f32 %v1577, 0.044715
      %v1678 = vmul.f32 %v1578, 0.044715
      %v1679 = vmul.f32 %v1579, 0.044715
      %v1680 = vmul.f32 %v1580, 0.044715
      %v1681 = vmul.f32 %v1581, 0.044715
      %v1682 = vmul.f32 %v1582, 0.044715
      %v1683 = vmul.f32 %v1583, 0.044715
      %v1684 = vmul.f32 %v1584, 0.044715
      %v1685 = vmul.f32 %v1585, 0.044715
      %v1686 = vmul.f32 %v1586, 0.044715
      %v1687 = vmul.f32 %v1587, 0.044715
      %v1688 = vmul.f32 %v1588, 0.044715
      %v1689 = vmul.f32 %v1589, 0.044715
      %v1690 = vmul.f32 %v1590, 0.044715
      %v1691 = vmul.f32 %v1591, 0.044715
      %v1692 = vmul.f32 %v1592, 0.044715
      %v1693 = vmul.f32 %v1593, 0.044715
      %v1694 = vmul.f32 %v1594, 0.044715
      %v1695 = vmul.f32 %v1595, 0.044715
      %v1696 = vmul.f32 %v1596, 0.044715
      %v1697 = vmul.f32 %v1597, 0.044715
      %v1698 = vmul.f32 %v1598, 0.044715
      %v1699 = vmul.f32 %v1599, 0.044715
      %v1700 = vmul.f32 %v1600, 0.044715
      %v1701 = vmul.f32 %v1601, 0.044715
      %v1702 = vmul.f32 %v1602, 0.044715
      %v1703 = vmul.f32 %v1603, 0.044715
      %v1704 = vadd.f32 %v1122, %v1604
      %v1705 = vadd.f32 %v1195, %v1605
      %v1706 = vadd.f32 %v1268, %v1606
      %v1707 = vadd.f32 %v1341, %v1607
      %v1708 = vadd.f32 %v1124, %v1608
      %v1709 = vadd.f32 %v1197, %v1609
      %v1710 = vadd.f32 %v1270, %v1610
      %v1711 = vadd.f32 %v1343, %v1611
      %v1712 = vadd.f32 %v1127, %v1612
      %v1713 = vadd.f32 %v1200, %v1613
      %v1714 = vadd.f32 %v1273, %v1614
      %v1715 = vadd.f32 %v1346, %v1615
      %v1716 = vadd.f32 %v1129, %v1616
      %v1717 = vadd.f32 %v1202, %v1617
      %v1718 = vadd.f32 %v1275, %v1618
      %v1719 = vadd.f32 %v1348, %v1619
      %v1720 = vadd.f32 %v1132, %v1620
      %v1721 = vadd.f32 %v1205, %v1621
      %v1722 = vadd.f32 %v1278, %v1622
      %v1723 = vadd.f32 %v1351, %v1623
      %v1724 = vadd.f32 %v1134, %v1624
      %v1725 = vadd.f32 %v1207, %v1625
      %v1726 = vadd.f32 %v1280, %v1626
      %v1727 = vadd.f32 %v1353, %v1627
      %v1728 = vadd.f32 %v1137, %v1628
      %v1729 = vadd.f32 %v1210, %v1629
      %v1730 = vadd.f32 %v1283, %v1630
      %v1731 = vadd.f32 %v1356, %v1631
      %v1732 = vadd.f32 %v1139, %v1632
      %v1733 = vadd.f32 %v1212, %v1633
      %v1734 = vadd.f32 %v1285, %v1634
      %v1735 = vadd.f32 %v1358, %v1635
      %v1736 = vadd.f32 %v1142, %v1636
      %v1737 = vadd.f32 %v1215, %v1637
      %v1738 = vadd.f32 %v1288, %v1638
      %v1739 = vadd.f32 %v1361, %v1639
      %v1740 = vadd.f32 %v1144, %v1640
      %v1741 = vadd.f32 %v1217, %v1641
      %v1742 = vadd.f32 %v1290, %v1642
      %v1743 = vadd.f32 %v1363, %v1643
      %v1744 = vadd.f32 %v1147, %v1644
      %v1745 = vadd.f32 %v1220, %v1645
      %v1746 = vadd.f32 %v1293, %v1646
      %v1747 = vadd.f32 %v1366, %v1647
      %v1748 = vadd.f32 %v1149, %v1648
      %v1749 = vadd.f32 %v1222, %v1649
      %v1750 = vadd.f32 %v1295, %v1650
      %v1751 = vadd.f32 %v1368, %v1651
      %v1752 = vadd.f32 %v1152, %v1652
      %v1753 = vadd.f32 %v1225, %v1653
      %v1754 = vadd.f32 %v1298, %v1654
      %v1755 = vadd.f32 %v1371, %v1655
      %v1756 = vadd.f32 %v1154, %v1656
      %v1757 = vadd.f32 %v1227, %v1657
      %v1758 = vadd.f32 %v1300, %v1658
      %v1759 = vadd.f32 %v1373, %v1659
      %v1760 = vadd.f32 %v1157, %v1660
      %v1761 = vadd.f32 %v1230, %v1661
      %v1762 = vadd.f32 %v1303, %v1662
      %v1763 = vadd.f32 %v1376, %v1663
      %v1764 = vadd.f32 %v1159, %v1664
      %v1765 = vadd.f32 %v1232, %v1665
      %v1766 = vadd.f32 %v1305, %v1666
      %v1767 = vadd.f32 %v1378, %v1667
      %v1768 = vadd.f32 %v1162, %v1668
      %v1769 = vadd.f32 %v1235, %v1669
      %v1770 = vadd.f32 %v1308, %v1670
      %v1771 = vadd.f32 %v1381, %v1671
      %v1772 = vadd.f32 %v1164, %v1672
      %v1773 = vadd.f32 %v1237, %v1673
      %v1774 = vadd.f32 %v1310, %v1674
      %v1775 = vadd.f32 %v1383, %v1675
      %v1776 = vadd.f32 %v1167, %v1676
      %v1777 = vadd.f32 %v1240, %v1677
      %v1778 = vadd.f32 %v1313, %v1678
      %v1779 = vadd.f32 %v1386, %v1679
      %v1780 = vadd.f32 %v1169, %v1680
      %v1781 = vadd.f32 %v1242, %v1681
      %v1782 = vadd.f32 %v1315, %v1682
      %v1783 = vadd.f32 %v1388, %v1683
      %v1784 = vadd.f32 %v1172, %v1684
      %v1785 = vadd.f32 %v1245, %v1685
      %v1786 = vadd.f32 %v1318, %v1686
      %v1787 = vadd.f32 %v1391, %v1687
      %v1788 = vadd.f32 %v1174, %v1688
      %v1789 = vadd.f32 %v1247, %v1689
      %v1790 = vadd.f32 %v1320, %v1690
      %v1791 = vadd.f32 %v1393, %v1691
      %v1792 = vadd.f32 %v1177, %v1692
      %v1793 = vadd.f32 %v1250, %v1693
      %v1794 = vadd.f32 %v1323, %v1694
      %v1795 = vadd.f32 %v1396, %v1695
      %v1796 = vadd.f32 %v1179, %v1696
      %v1797 = vadd.f32 %v1252, %v1697
      %v1798 = vadd.f32 %v1325, %v1698
      %v1799 = vadd.f32 %v1398, %v1699
      %v1800 = vadd.f32 %v1182, %v1700
      %v1801 = vadd.f32 %v1255, %v1701
      %v1802 = vadd.f32 %v1328, %v1702
      %v1803 = vadd.f32 %v1401, %v1703
      %v1804 = vmul.f32 %v1704, 0.7978846
      %v1805 = vmul.f32 %v1705, 0.7978846
      %v1806 = vmul.f32 %v1706, 0.7978846
      %v1807 = vmul.f32 %v1707, 0.7978846
      %v1808 = vmul.f32 %v1708, 0.7978846
      %v1809 = vmul.f32 %v1709, 0.7978846
      %v1810 = vmul.f32 %v1710, 0.7978846
      %v1811 = vmul.f32 %v1711, 0.7978846
      %v1812 = vmul.f32 %v1712, 0.7978846
      %v1813 = vmul.f32 %v1713, 0.7978846
      %v1814 = vmul.f32 %v1714, 0.7978846
      %v1815 = vmul.f32 %v1715, 0.7978846
      %v1816 = vmul.f32 %v1716, 0.7978846
      %v1817 = vmul.f32 %v1717, 0.7978846
      %v1818 = vmul.f32 %v1718, 0.7978846
      %v1819 = vmul.f32 %v1719, 0.7978846
      %v1820 = vmul.f32 %v1720, 0.7978846
      %v1821 = vmul.f32 %v1721, 0.7978846
      %v1822 = vmul.f32 %v1722, 0.7978846
      %v1823 = vmul.f32 %v1723, 0.7978846
      %v1824 = vmul.f32 %v1724, 0.7978846
      %v1825 = vmul.f32 %v1725, 0.7978846
      %v1826 = vmul.f32 %v1726, 0.7978846
      %v1827 = vmul.f32 %v1727, 0.7978846
      %v1828 = vmul.f32 %v1728, 0.7978846
      %v1829 = vmul.f32 %v1729, 0.7978846
      %v1830 = vmul.f32 %v1730, 0.7978846
      %v1831 = vmul.f32 %v1731, 0.7978846
      %v1832 = vmul.f32 %v1732, 0.7978846
      %v1833 = vmul.f32 %v1733, 0.7978846
      %v1834 = vmul.f32 %v1734, 0.7978846
      %v1835 = vmul.f32 %v1735, 0.7978846
      %v1836 = vmul.f32 %v1736, 0.7978846
      %v1837 = vmul.f32 %v1737, 0.7978846
      %v1838 = vmul.f32 %v1738, 0.7978846
      %v1839 = vmul.f32 %v1739, 0.7978846
      %v1840 = vmul.f32 %v1740, 0.7978846
      %v1841 = vmul.f32 %v1741, 0.7978846
      %v1842 = vmul.f32 %v1742, 0.7978846
      %v1843 = vmul.f32 %v1743, 0.7978846
      %v1844 = vmul.f32 %v1744, 0.7978846
      %v1845 = vmul.f32 %v1745, 0.7978846
      %v1846 = vmul.f32 %v1746, 0.7978846
      %v1847 = vmul.f32 %v1747, 0.7978846
      %v1848 = vmul.f32 %v1748, 0.7978846
      %v1849 = vmul.f32 %v1749, 0.7978846
      %v1850 = vmul.f32 %v1750, 0.7978846
      %v1851 = vmul.f32 %v1751, 0.7978846
      %v1852 = vmul.f32 %v1752, 0.7978846
      %v1853 = vmul.f32 %v1753, 0.7978846
      %v1854 = vmul.f32 %v1754, 0.7978846
      %v1855 = vmul.f32 %v1755, 0.7978846
      %v1856 = vmul.f32 %v1756, 0.7978846
      %v1857 = vmul.f32 %v1757, 0.7978846
      %v1858 = vmul.f32 %v1758, 0.7978846
      %v1859 = vmul.f32 %v1759, 0.7978846
      %v1860 = vmul.f32 %v1760, 0.7978846
      %v1861 = vmul.f32 %v1761, 0.7978846
      %v1862 = vmul.f32 %v1762, 0.7978846
      %v1863 = vmul.f32 %v1763, 0.7978846
      %v1864 = vmul.f32 %v1764, 0.7978846
      %v1865 = vmul.f32 %v1765, 0.7978846
      %v1866 = vmul.f32 %v1766, 0.7978846
      %v1867 = vmul.f32 %v1767, 0.7978846
      %v1868 = vmul.f32 %v1768, 0.7978846
      %v1869 = vmul.f32 %v1769, 0.7978846
      %v1870 = vmul.f32 %v1770, 0.7978846
      %v1871 = vmul.f32 %v1771, 0.7978846
      %v1872 = vmul.f32 %v1772, 0.7978846
      %v1873 = vmul.f32 %v1773, 0.7978846
      %v1874 = vmul.f32 %v1774, 0.7978846
      %v1875 = vmul.f32 %v1775, 0.7978846
      %v1876 = vmul.f32 %v1776, 0.7978846
      %v1877 = vmul.f32 %v1777, 0.7978846
      %v1878 = vmul.f32 %v1778, 0.7978846
      %v1879 = vmul.f32 %v1779, 0.7978846
      %v1880 = vmul.f32 %v1780, 0.7978846
      %v1881 = vmul.f32 %v1781, 0.7978846
      %v1882 = vmul.f32 %v1782, 0.7978846
      %v1883 = vmul.f32 %v1783, 0.7978846
      %v1884 = vmul.f32 %v1784, 0.7978846
      %v1885 = vmul.f32 %v1785, 0.7978846
      %v1886 = vmul.f32 %v1786, 0.7978846
      %v1887 = vmul.f32 %v1787, 0.7978846
      %v1888 = vmul.f32 %v1788, 0.7978846
      %v1889 = vmul.f32 %v1789, 0.7978846
      %v1890 = vmul.f32 %v1790, 0.7978846
      %v1891 = vmul.f32 %v1791, 0.7978846
      %v1892 = vmul.f32 %v1792, 0.7978846
      %v1893 = vmul.f32 %v1793, 0.7978846
      %v1894 = vmul.f32 %v1794, 0.7978846
      %v1895 = vmul.f32 %v1795, 0.7978846
      %v1896 = vmul.f32 %v1796, 0.7978846
      %v1897 = vmul.f32 %v1797, 0.7978846
      %v1898 = vmul.f32 %v1798, 0.7978846
      %v1899 = vmul.f32 %v1799, 0.7978846
      %v1900 = vmul.f32 %v1800, 0.7978846
      %v1901 = vmul.f32 %v1801, 0.7978846
      %v1902 = vmul.f32 %v1802, 0.7978846
      %v1903 = vmul.f32 %v1803, 0.7978846
      %v1904 = vtanh.pop %v1804
      %v1905 = vtanh.pop %v1805
      %v1906 = vtanh.pop %v1806
      %v1907 = vtanh.pop %v1807
      %v1908 = vtanh.pop %v1808
      %v1909 = vtanh.pop %v1809
      %v1910 = vtanh.pop %v1810
      %v1911 = vtanh.pop %v1811
      %v1912 = vtanh.pop %v1812
      %v1913 = vtanh.pop %v1813
      %v1914 = vtanh.pop %v1814
      %v1915 = vtanh.pop %v1815
      %v1916 = vtanh.pop %v1816
      %v1917 = vtanh.pop %v1817
      %v1918 = vtanh.pop %v1818
      %v1919 = vtanh.pop %v1819
      %v1920 = vtanh.pop %v1820
      %v1921 = vtanh.pop %v1821
      %v1922 = vtanh.pop %v1822
      %v1923 = vtanh.pop %v1823
      %v1924 = vtanh.pop %v1824
      %v1925 = vtanh.pop %v1825
      %v1926 = vtanh.pop %v1826
      %v1927 = vtanh.pop %v1827
      %v1928 = vtanh.pop %v1828
      %v1929 = vtanh.pop %v1829
      %v1930 = vtanh.pop %v1830
      %v1931 = vtanh.pop %v1831
      %v1932 = vtanh.pop %v1832
      %v1933 = vtanh.pop %v1833
      %v1934 = vtanh.pop %v1834
      %v1935 = vtanh.pop %v1835
      %v1936 = vtanh.pop %v1836
      %v1937 = vtanh.pop %v1837
      %v1938 = vtanh.pop %v1838
      %v1939 = vtanh.pop %v1839
      %v1940 = vtanh.pop %v1840
      %v1941 = vtanh.pop %v1841
      %v1942 = vtanh.pop %v1842
      %v1943 = vtanh.pop %v1843
      %v1944 = vtanh.pop %v1844
      %v1945 = vtanh.pop %v1845
      %v1946 = vtanh.pop %v1846
      %v1947 = vtanh.pop %v1847
      %v1948 = vtanh.pop %v1848
      %v1949 = vtanh.pop %v1849
      %v1950 = vtanh.pop %v1850
      %v1951 = vtanh.pop %v1851
      %v1952 = vtanh.pop %v1852
      %v1953 = vtanh.pop %v1853
      %v1954 = vtanh.pop %v1854
      %v1955 = vtanh.pop %v1855
      %v1956 = vtanh.pop %v1856
      %v1957 = vtanh.pop %v1857
      %v1958 = vtanh.pop %v1858
      %v1959 = vtanh.pop %v1859
      %v1960 = vtanh.pop %v1860
      %v1961 = vtanh.pop %v1861
      %v1962 = vtanh.pop %v1862
      %v1963 = vtanh.pop %v1863
      %v1964 = vtanh.pop %v1864
      %v1965 = vtanh.pop %v1865
      %v1966 = vtanh.pop %v1866
      %v1967 = vtanh.pop %v1867
      %v1968 = vtanh.pop %v1868
      %v1969 = vtanh.pop %v1869
      %v1970 = vtanh.pop %v1870
      %v1971 = vtanh.pop %v1871
      %v1972 = vtanh.pop %v1872
      %v1973 = vtanh.pop %v1873
      %v1974 = vtanh.pop %v1874
      %v1975 = vtanh.pop %v1875
      %v1976 = vtanh.pop %v1876
      %v1977 = vtanh.pop %v1877
      %v1978 = vtanh.pop %v1878
      %v1979 = vtanh.pop %v1879
      %v1980 = vtanh.pop %v1880
      %v1981 = vtanh.pop %v1881
      %v1982 = vtanh.pop %v1882
      %v1983 = vtanh.pop %v1883
      %v1984 = vtanh.pop %v1884
      %v1985 = vtanh.pop %v1885
      %v1986 = vtanh.pop %v1886
      %v1987 = vtanh.pop %v1887
      %v1988 = vtanh.pop %v1888
      %v1989 = vtanh.pop %v1889
      %v1990 = vtanh.pop %v1890
      %v1991 = vtanh.pop %v1891
      %v1992 = vtanh.pop %v1892
      %v1993 = vtanh.pop %v1893
      %v1994 = vtanh.pop %v1894
      %v1995 = vtanh.pop %v1895
      %v1996 = vtanh.pop %v1896
      %v1997 = vtanh.pop %v1897
      %v1998 = vtanh.pop %v1898
      %v1999 = vtanh.pop %v1899
      %v2000 = vtanh.pop %v1900
      %v2001 = vtanh.pop %v1901
      %v2002 = vtanh.pop %v1902
      %v2003 = vtanh.pop %v1903
      %v2004 = vadd.f32 %v1904, 1.0
      %v2005 = vadd.f32 %v1905, 1.0
      %v2006 = vadd.f32 %v1906, 1.0
      %v2007 = vadd.f32 %v1907, 1.0
      %v2008 = vadd.f32 %v1908, 1.0
      %v2009 = vadd.f32 %v1909, 1.0
      %v2010 = vadd.f32 %v1910, 1.0
      %v2011 = vadd.f32 %v1911, 1.0
      %v2012 = vadd.f32 %v1912, 1.0
      %v2013 = vadd.f32 %v1913, 1.0
      %v2014 = vadd.f32 %v1914, 1.0
      %v2015 = vadd.f32 %v1915, 1.0
      %v2016 = vadd.f32 %v1916, 1.0
      %v2017 = vadd.f32 %v1917, 1.0
      %v2018 = vadd.f32 %v1918, 1.0
      %v2019 = vadd.f32 %v1919, 1.0
      %v2020 = vadd.f32 %v1920, 1.0
      %v2021 = vadd.f32 %v1921, 1.0
      %v2022 = vadd.f32 %v1922, 1.0
      %v2023 = vadd.f32 %v1923, 1.0
      %v2024 = vadd.f32 %v1924, 1.0
      %v2025 = vadd.f32 %v1925, 1.0
      %v2026 = vadd.f32 %v1926, 1.0
      %v2027 = vadd.f32 %v1927, 1.0
      %v2028 = vadd.f32 %v1928, 1.0
      %v2029 = vadd.f32 %v1929, 1.0
      %v2030 = vadd.f32 %v1930, 1.0
      %v2031 = vadd.f32 %v1931, 1.0
      %v2032 = vadd.f32 %v1932, 1.0
      %v2033 = vadd.f32 %v1933, 1.0
      %v2034 = vadd.f32 %v1934, 1.0
      %v2035 = vadd.f32 %v1935, 1.0
      %v2036 = vadd.f32 %v1936, 1.0
      %v2037 = vadd.f32 %v1937, 1.0
      %v2038 = vadd.f32 %v1938, 1.0
      %v2039 = vadd.f32 %v1939, 1.0
      %v2040 = vadd.f32 %v1940, 1.0
      %v2041 = vadd.f32 %v1941, 1.0
      %v2042 = vadd.f32 %v1942, 1.0
      %v2043 = vadd.f32 %v1943, 1.0
      %v2044 = vadd.f32 %v1944, 1.0
      %v2045 = vadd.f32 %v1945, 1.0
      %v2046 = vadd.f32 %v1946, 1.0
      %v2047 = vadd.f32 %v1947, 1.0
      %v2048 = vadd.f32 %v1948, 1.0
      %v2049 = vadd.f32 %v1949, 1.0
      %v2050 = vadd.f32 %v1950, 1.0
      %v2051 = vadd.f32 %v1951, 1.0
      %v2052 = vadd.f32 %v1952, 1.0
      %v2053 = vadd.f32 %v1953, 1.0
      %v2054 = vadd.f32 %v1954, 1.0
      %v2055 = vadd.f32 %v1955, 1.0
      %v2056 = vadd.f32 %v1956, 1.0
      %v2057 = vadd.f32 %v1957, 1.0
      %v2058 = vadd.f32 %v1958, 1.0
      %v2059 = vadd.f32 %v1959, 1.0
      %v2060 = vadd.f32 %v1960, 1.0
      %v2061 = vadd.f32 %v1961, 1.0
      %v2062 = vadd.f32 %v1962, 1.0
      %v2063 = vadd.f32 %v1963, 1.0
      %v2064 = vadd.f32 %v1964, 1.0
      %v2065 = vadd.f32 %v1965, 1.0
      %v2066 = vadd.f32 %v1966, 1.0
      %v2067 = vadd.f32 %v1967, 1.0
      %v2068 = vadd.f32 %v1968, 1.0
      %v2069 = vadd.f32 %v1969, 1.0
      %v2070 = vadd.f32 %v1970, 1.0
      %v2071 = vadd.f32 %v1971, 1.0
      %v2072 = vadd.f32 %v1972, 1.0
      %v2073 = vadd.f32 %v1973, 1.0
      %v2074 = vadd.f32 %v1974, 1.0
      %v2075 = vadd.f32 %v1975, 1.0
      %v2076 = vadd.f32 %v1976, 1.0
      %v2077 = vadd.f32 %v1977, 1.0
      %v2078 = vadd.f32 %v1978, 1.0
      %v2079 = vadd.f32 %v1979, 1.0
      %v2080 = vadd.f32 %v1980, 1.0
      %v2081 = vadd.f32 %v1981, 1.0
      %v2082 = vadd.f32 %v1982, 1.0
      %v2083 = vadd.f32 %v1983, 1.0
      %v2084 = vadd.f32 %v1984, 1.0
      %v2085 = vadd.f32 %v1985, 1.0
      %v2086 = vadd.f32 %v1986, 1.0
      %v2087 = vadd.f32 %v1987, 1.0
      %v2088 = vadd.f32 %v1988, 1.0
      %v2089 = vadd.f32 %v1989, 1.0
      %v2090 = vadd.f32 %v1990, 1.0
      %v2091 = vadd.f32 %v1991, 1.0
      %v2092 = vadd.f32 %v1992, 1.0
      %v2093 = vadd.f32 %v1993, 1.0
      %v2094 = vadd.f32 %v1994, 1.0
      %v2095 = vadd.f32 %v1995, 1.0
      %v2096 = vadd.f32 %v1996, 1.0
      %v2097 = vadd.f32 %v1997, 1.0
      %v2098 = vadd.f32 %v1998, 1.0
      %v2099 = vadd.f32 %v1999, 1.0
      %v2100 = vadd.f32 %v2000, 1.0
      %v2101 = vadd.f32 %v2001, 1.0
      %v2102 = vadd.f32 %v2002, 1.0
      %v2103 = vadd.f32 %v2003, 1.0
      %v2104 = vmul.f32 %v2004, 0.5
      %v2105 = vmul.f32 %v2005, 0.5
      %v2106 = vmul.f32 %v2006, 0.5
      %v2107 = vmul.f32 %v2007, 0.5
      %v2108 = vmul.f32 %v2008, 0.5
      %v2109 = vmul.f32 %v2009, 0.5
      %v2110 = vmul.f32 %v2010, 0.5
      %v2111 = vmul.f32 %v2011, 0.5
      %v2112 = vmul.f32 %v2012, 0.5
      %v2113 = vmul.f32 %v2013, 0.5
      %v2114 = vmul.f32 %v2014, 0.5
      %v2115 = vmul.f32 %v2015, 0.5
      %v2116 = vmul.f32 %v2016, 0.5
      %v2117 = vmul.f32 %v2017, 0.5
      %v2118 = vmul.f32 %v2018, 0.5
      %v2119 = vmul.f32 %v2019, 0.5
      %v2120 = vmul.f32 %v2020, 0.5
      %v2121 = vmul.f32 %v2021, 0.5
      %v2122 = vmul.f32 %v2022, 0.5
      %v2123 = vmul.f32 %v2023, 0.5
      %v2124 = vmul.f32 %v2024, 0.5
      %v2125 = vmul.f32 %v2025, 0.5
      %v2126 = vmul.f32 %v2026, 0.5
      %v2127 = vmul.f32 %v2027, 0.5
      %v2128 = vmul.f32 %v2028, 0.5
      %v2129 = vmul.f32 %v2029, 0.5
      %v2130 = vmul.f32 %v2030, 0.5
      %v2131 = vmul.f32 %v2031, 0.5
      %v2132 = vmul.f32 %v2032, 0.5
      %v2133 = vmul.f32 %v2033, 0.5
      %v2134 = vmul.f32 %v2034, 0.5
      %v2135 = vmul.f32 %v2035, 0.5
      %v2136 = vmul.f32 %v2036, 0.5
      %v2137 = vmul.f32 %v2037, 0.5
      %v2138 = vmul.f32 %v2038, 0.5
      %v2139 = vmul.f32 %v2039, 0.5
      %v2140 = vmul.f32 %v2040, 0.5
      %v2141 = vmul.f32 %v2041, 0.5
      %v2142 = vmul.f32 %v2042, 0.5
      %v2143 = vmul.f32 %v2043, 0.5
      %v2144 = vmul.f32 %v2044, 0.5
      %v2145 = vmul.f32 %v2045, 0.5
      %v2146 = vmul.f32 %v2046, 0.5
      %v2147 = vmul.f32 %v2047, 0.5
      %v2148 = vmul.f32 %v2048, 0.5
      %v2149 = vmul.f32 %v2049, 0.5
      %v2150 = vmul.f32 %v2050, 0.5
      %v2151 = vmul.f32 %v2051, 0.5
      %v2152 = vmul.f32 %v2052, 0.5
      %v2153 = vmul.f32 %v2053, 0.5
      %v2154 = vmul.f32 %v2054, 0.5
      %v2155 = vmul.f32 %v2055, 0.5
      %v2156 = vmul.f32 %v2056, 0.5
      %v2157 = vmul.f32 %v2057, 0.5
      %v2158 = vmul.f32 %v2058, 0.5
      %v2159 = vmul.f32 %v2059, 0.5
      %v2160 = vmul.f32 %v2060, 0.5
      %v2161 = vmul.f32 %v2061, 0.5
      %v2162 = vmul.f32 %v2062, 0.5
      %v2163 = vmul.f32 %v2063, 0.5
      %v2164 = vmul.f32 %v2064, 0.5
      %v2165 = vmul.f32 %v2065, 0.5
      %v2166 = vmul.f32 %v2066, 0.5
      %v2167 = vmul.f32 %v2067, 0.5
      %v2168 = vmul.f32 %v2068, 0.5
      %v2169 = vmul.f32 %v2069, 0.5
      %v2170 = vmul.f32 %v2070, 0.5
      %v2171 = vmul.f32 %v2071, 0.5
      %v2172 = vmul.f32 %v2072, 0.5
      %v2173 = vmul.f32 %v2073, 0.5
      %v2174 = vmul.f32 %v2074, 0.5
      %v2175 = vmul.f32 %v2075, 0.5
      %v2176 = vmul.f32 %v2076, 0.5
      %v2177 = vmul.f32 %v2077, 0.5
      %v2178 = vmul.f32 %v2078, 0.5
      %v2179 = vmul.f32 %v2079, 0.5
      %v2180 = vmul.f32 %v2080, 0.5
      %v2181 = vmul.f32 %v2081, 0.5
      %v2182 = vmul.f32 %v2082, 0.5
      %v2183 = vmul.f32 %v2083, 0.5
      %v2184 = vmul.f32 %v2084, 0.5
      %v2185 = vmul.f32 %v2085, 0.5
      %v2186 = vmul.f32 %v2086, 0.5
      %v2187 = vmul.f32 %v2087, 0.5
      %v2188 = vmul.f32 %v2088, 0.5
      %v2189 = vmul.f32 %v2089, 0.5
      %v2190 = vmul.f32 %v2090, 0.5
      %v2191 = vmul.f32 %v2091, 0.5
      %v2192 = vmul.f32 %v2092, 0.5
      %v2193 = vmul.f32 %v2093, 0.5
      %v2194 = vmul.f32 %v2094, 0.5
      %v2195 = vmul.f32 %v2095, 0.5
      %v2196 = vmul.f32 %v2096, 0.5
      %v2197 = vmul.f32 %v2097, 0.5
      %v2198 = vmul.f32 %v2098, 0.5
      %v2199 = vmul.f32 %v2099, 0.5
      %v2200 = vmul.f32 %v2100, 0.5
      %v2201 = vmul.f32 %v2101, 0.5
      %v2202 = vmul.f32 %v2102, 0.5
      %v2203 = vmul.f32 %v2103, 0.5
      %v2204 = vmul.f32 %v1122, %v2104
      %v2205 = vmul.f32 %v1195, %v2105
      %v2206 = vmul.f32 %v1268, %v2106
      %v2207 = vmul.f32 %v1341, %v2107
      %v2208 = vmul.f32 %v1124, %v2108
      %v2209 = vmul.f32 %v1197, %v2109
      %v2210 = vmul.f32 %v1270, %v2110
      %v2211 = vmul.f32 %v1343, %v2111
      %v2212 = vmul.f32 %v1127, %v2112
      %v2213 = vmul.f32 %v1200, %v2113
      %v2214 = vmul.f32 %v1273, %v2114
      %v2215 = vmul.f32 %v1346, %v2115
      %v2216 = vmul.f32 %v1129, %v2116
      %v2217 = vmul.f32 %v1202, %v2117
      %v2218 = vmul.f32 %v1275, %v2118
      %v2219 = vmul.f32 %v1348, %v2119
      %v2220 = vmul.f32 %v1132, %v2120
      %v2221 = vmul.f32 %v1205, %v2121
      %v2222 = vmul.f32 %v1278, %v2122
      %v2223 = vmul.f32 %v1351, %v2123
      %v2224 = vmul.f32 %v1134, %v2124
      %v2225 = vmul.f32 %v1207, %v2125
      %v2226 = vmul.f32 %v1280, %v2126
      %v2227 = vmul.f32 %v1353, %v2127
      %v2228 = vmul.f32 %v1137, %v2128
      %v2229 = vmul.f32 %v1210, %v2129
      %v2230 = vmul.f32 %v1283, %v2130
      %v2231 = vmul.f32 %v1356, %v2131
      %v2232 = vmul.f32 %v1139, %v2132
      %v2233 = vmul.f32 %v1212, %v2133
      %v2234 = vmul.f32 %v1285, %v2134
      %v2235 = vmul.f32 %v1358, %v2135
      %v2236 = vmul.f32 %v1142, %v2136
      %v2237 = vmul.f32 %v1215, %v2137
      %v2238 = vmul.f32 %v1288, %v2138
      %v2239 = vmul.f32 %v1361, %v2139
      %v2240 = vmul.f32 %v1144, %v2140
      %v2241 = vmul.f32 %v1217, %v2141
      %v2242 = vmul.f32 %v1290, %v2142
      %v2243 = vmul.f32 %v1363, %v2143
      %v2244 = vmul.f32 %v1147, %v2144
      %v2245 = vmul.f32 %v1220, %v2145
      %v2246 = vmul.f32 %v1293, %v2146
      %v2247 = vmul.f32 %v1366, %v2147
      %v2248 = vmul.f32 %v1149, %v2148
      %v2249 = vmul.f32 %v1222, %v2149
      %v2250 = vmul.f32 %v1295, %v2150
      %v2251 = vmul.f32 %v1368, %v2151
      %v2252 = vmul.f32 %v1152, %v2152
      %v2253 = vmul.f32 %v1225, %v2153
      %v2254 = vmul.f32 %v1298, %v2154
      %v2255 = vmul.f32 %v1371, %v2155
      %v2256 = vmul.f32 %v1154, %v2156
      %v2257 = vmul.f32 %v1227, %v2157
      %v2258 = vmul.f32 %v1300, %v2158
      %v2259 = vmul.f32 %v1373, %v2159
      %v2260 = vmul.f32 %v1157, %v2160
      %v2261 = vmul.f32 %v1230, %v2161
      %v2262 = vmul.f32 %v1303, %v2162
      %v2263 = vmul.f32 %v1376, %v2163
      %v2264 = vmul.f32 %v1159, %v2164
      %v2265 = vmul.f32 %v1232, %v2165
      %v2266 = vmul.f32 %v1305, %v2166
      %v2267 = vmul.f32 %v1378, %v2167
      %v2268 = vmul.f32 %v1162, %v2168
      %v2269 = vmul.f32 %v1235, %v2169
      %v2270 = vmul.f32 %v1308, %v2170
      %v2271 = vmul.f32 %v1381, %v2171
      %v2272 = vmul.f32 %v1164, %v2172
      %v2273 = vmul.f32 %v1237, %v2173
      %v2274 = vmul.f32 %v1310, %v2174
      %v2275 = vmul.f32 %v1383, %v2175
      %v2276 = vmul.f32 %v1167, %v2176
      %v2277 = vmul.f32 %v1240, %v2177
      %v2278 = vmul.f32 %v1313, %v2178
      %v2279 = vmul.f32 %v1386, %v2179
      %v2280 = vmul.f32 %v1169, %v2180
      %v2281 = vmul.f32 %v1242, %v2181
      %v2282 = vmul.f32 %v1315, %v2182
      %v2283 = vmul.f32 %v1388, %v2183
      %v2284 = vmul.f32 %v1172, %v2184
      %v2285 = vmul.f32 %v1245, %v2185
      %v2286 = vmul.f32 %v1318, %v2186
      %v2287 = vmul.f32 %v1391, %v2187
      %v2288 = vmul.f32 %v1174, %v2188
      %v2289 = vmul.f32 %v1247, %v2189
      %v2290 = vmul.f32 %v1320, %v2190
      %v2291 = vmul.f32 %v1393, %v2191
      %v2292 = vmul.f32 %v1177, %v2192
      %v2293 = vmul.f32 %v1250, %v2193
      %v2294 = vmul.f32 %v1323, %v2194
      %v2295 = vmul.f32 %v1396, %v2195
      %v2296 = vmul.f32 %v1179, %v2196
      %v2297 = vmul.f32 %v1252, %v2197
      %v2298 = vmul.f32 %v1325, %v2198
      %v2299 = vmul.f32 %v1398, %v2199
      %v2300 = vmul.f32 %v1182, %v2200
      %v2301 = vmul.f32 %v1255, %v2201
      %v2302 = vmul.f32 %v1328, %v2202
      %v2303 = vmul.f32 %v1401, %v2203
      %v2304 = vpack.c.bf16 %v2208, %v2204
      %v2305 = vpack.c.bf16 %v2209, %v2205
      %v2306 = vpack.c.bf16 %v2210, %v2206
      %v2307 = vpack.c.bf16 %v2211, %v2207
      %v2308 = vpack.c.bf16 %v2216, %v2212
      %v2309 = vpack.c.bf16 %v2217, %v2213
      %v2310 = vpack.c.bf16 %v2218, %v2214
      %v2311 = vpack.c.bf16 %v2219, %v2215
      %v2312 = vpack.c.bf16 %v2224, %v2220
      %v2313 = vpack.c.bf16 %v2225, %v2221
      %v2314 = vpack.c.bf16 %v2226, %v2222
      %v2315 = vpack.c.bf16 %v2227, %v2223
      %v2316 = vpack.c.bf16 %v2232, %v2228
      %v2317 = vpack.c.bf16 %v2233, %v2229
      %v2318 = vpack.c.bf16 %v2234, %v2230
      %v2319 = vpack.c.bf16 %v2235, %v2231
      %v2320 = vpack.c.bf16 %v2240, %v2236
      %v2321 = vpack.c.bf16 %v2241, %v2237
      %v2322 = vpack.c.bf16 %v2242, %v2238
      %v2323 = vpack.c.bf16 %v2243, %v2239
      %v2324 = vpack.c.bf16 %v2248, %v2244
      %v2325 = vpack.c.bf16 %v2249, %v2245
      %v2326 = vpack.c.bf16 %v2250, %v2246
      %v2327 = vpack.c.bf16 %v2251, %v2247
      %v2328 = vpack.c.bf16 %v2256, %v2252
      %v2329 = vpack.c.bf16 %v2257, %v2253
      %v2330 = vpack.c.bf16 %v2258, %v2254
      %v2331 = vpack.c.bf16 %v2259, %v2255
      %v2332 = vpack.c.bf16 %v2264, %v2260
      %v2333 = vpack.c.bf16 %v2265, %v2261
      %v2334 = vpack.c.bf16 %v2266, %v2262
      %v2335 = vpack.c.bf16 %v2267, %v2263
      %v2336 = vpack.c.bf16 %v2272, %v2268
      %v2337 = vpack.c.bf16 %v2273, %v2269
      %v2338 = vpack.c.bf16 %v2274, %v2270
      %v2339 = vpack.c.bf16 %v2275, %v2271
      %v2340 = vpack.c.bf16 %v2280, %v2276
      %v2341 = vpack.c.bf16 %v2281, %v2277
      %v2342 = vpack.c.bf16 %v2282, %v2278
      %v2343 = vpack.c.bf16 %v2283, %v2279
      %v2344 = vpack.c.bf16 %v2288, %v2284
      %v2345 = vpack.c.bf16 %v2289, %v2285
      %v2346 = vpack.c.bf16 %v2290, %v2286
      %v2347 = vpack.c.bf16 %v2291, %v2287
      %v2348 = vpack.c.bf16 %v2296, %v2292
      %v2349 = vpack.c.bf16 %v2297, %v2293
      %v2350 = vpack.c.bf16 %v2298, %v2294
      %v2351 = vpack.c.bf16 %v2299, %v2295
      %v2352 = vpack.c.bf16 %v2300, %v2300
      %v2353 = vpack.c.bf16 %v2301, %v2301
      %v2354 = vpack.c.bf16 %v2302, %v2302
      %v2355 = vpack.c.bf16 %v2303, %v2303
      %v2356 = vld [vmem:[%s5] sm:$0xf]
      %v2357 = vld [vmem:[%s5 + $0x4] sm:$0xf]
      %v2358 = vld [vmem:[%s5 + $0x8] sm:$0xf]
      %v2359 = vld [vmem:[%s5 + $0xc] sm:$0xf]
      %v2360 = vld [vmem:[%s5 + $0x10] sm:$0xf]
      %v2361 = vld [vmem:[%s5 + $0x14] sm:$0xf]
      %v2362 = vld [vmem:[%s5 + $0x18] sm:$0xf]
      %v2363 = vld [vmem:[%s5 + $0x1c] sm:$0xf]
      %v2364 = vld [vmem:[%s5 + $0x20] sm:$0xf]
      %v2365 = vld [vmem:[%s5 + $0x24] sm:$0xf]
      %v2366 = vld [vmem:[%s5 + $0x28] sm:$0xf]
      %v2367 = vld [vmem:[%s5 + $0x2c] sm:$0xf]
      %v2368 = vld [vmem:[%s5 + $0x30] sm:$0xf]
      %v2369 = vld [vmem:[%s5 + $0x34] sm:$0xf]
      %v2370 = vld [vmem:[%s5 + $0x38] sm:$0xf]
      %v2371 = vld [vmem:[%s5 + $0x3c] sm:$0xf]
      %v2372 = vld [vmem:[%s5 + $0x40] sm:$0xf]
      %v2373 = vld [vmem:[%s5 + $0x44] sm:$0xf]
      %v2374 = vld [vmem:[%s5 + $0x48] sm:$0xf]
      %v2375 = vld [vmem:[%s5 + $0x4c] sm:$0xf]
      %v2376 = vld [vmem:[%s5 + $0x50] sm:$0xf]
      %v2377 = vld [vmem:[%s5 + $0x54] sm:$0xf]
      %v2378 = vld [vmem:[%s5 + $0x58] sm:$0xf]
      %v2379 = vld [vmem:[%s5 + $0x5c] sm:$0xf]
      %v2380 = vld [vmem:[%s5 + $0x60] sm:$0xf]
      %v2381 = vld [vmem:[%s5 + $0x64] sm:$0xf]
      %v2382 = vld [vmem:[%s5 + $0x68] sm:$0xf]
      %v2383 = vld [vmem:[%s5 + $0x6c] sm:$0xf]
      %v2384 = vld [vmem:[%s5 + $0x70] sm:$0xf]
      %v2385 = vld [vmem:[%s5 + $0x74] sm:$0xf]
      %v2386 = vld [vmem:[%s5 + $0x78] sm:$0xf]
      %v2387 = vld [vmem:[%s5 + $0x7c] sm:$0xf]
      %v2388 = vld [vmem:[%s5 + $0x80] sm:$0xf]
      %v2389 = vld [vmem:[%s5 + $0x84] sm:$0xf]
      %v2390 = vld [vmem:[%s5 + $0x88] sm:$0xf]
      %v2391 = vld [vmem:[%s5 + $0x8c] sm:$0xf]
      %v2392 = vld [vmem:[%s5 + $0x90] sm:$0xf]
      %v2393 = vld [vmem:[%s5 + $0x94] sm:$0xf]
      %v2394 = vld [vmem:[%s5 + $0x98] sm:$0xf]
      %v2395 = vld [vmem:[%s5 + $0x9c] sm:$0xf]
      %v2396 = vld [vmem:[%s5 + $0xa0] sm:$0xf]
      %v2397 = vld [vmem:[%s5 + $0xa4] sm:$0xf]
      %v2398 = vld [vmem:[%s5 + $0xa8] sm:$0xf]
      %v2399 = vld [vmem:[%s5 + $0xac] sm:$0xf]
      %v2400 = vld [vmem:[%s5 + $0xb0] sm:$0xf]
      %v2401 = vld [vmem:[%s5 + $0xb4] sm:$0xf]
      %v2402 = vld [vmem:[%s5 + $0xb8] sm:$0xf]
      %v2403 = vld [vmem:[%s5 + $0xbc] sm:$0xf]
      %v2404 = vld [vmem:[%s5 + $0xc0] sm:$0xf]
      %v2405 = vld [vmem:[%s5 + $0xc4] sm:$0xf]
      %v2406 = vld [vmem:[%s5 + $0xc8] sm:$0xf]
      %v2407 = vld [vmem:[%s5 + $0xcc] sm:$0xf]
      %v2408 = vld [vmem:[%s5 + $0xd0] sm:$0xf]
      %v2409 = vld [vmem:[%s5 + $0xd4] sm:$0xf]
      %v2410 = vld [vmem:[%s5 + $0xd8] sm:$0xf]
      %v2411 = vld [vmem:[%s5 + $0xdc] sm:$0xf]
      %v2412 = vld [vmem:[%s5 + $0xe0] sm:$0xf]
      %v2413 = vld [vmem:[%s5 + $0xe4] sm:$0xf]
      %v2414 = vld [vmem:[%s5 + $0xe8] sm:$0xf]
      %v2415 = vld [vmem:[%s5 + $0xec] sm:$0xf]
      %v2416 = vld [vmem:[%s5 + $0xf0] sm:$0xf]
      %v2417 = vld [vmem:[%s5 + $0xf4] sm:$0xf]
      %v2418 = vld [vmem:[%s5 + $0xf8] sm:$0xf]
      %v2419 = vld [vmem:[%s5 + $0xfc] sm:$0xf]
      %v2420 = vld [vmem:[%s6] sm:$0x1]
      %v2422 = vperm.slane %v2420, 0
      %v2488 = vunpack.c.l.b16 %v2356
      %v2489 = vunpack.c.l.b16 %v2357
      %v2490 = vunpack.c.l.b16 %v2358
      %v2491 = vunpack.c.l.b16 %v2359
      %v2492 = vunpack.c.l.b16 %v2360
      %v2493 = vunpack.c.l.b16 %v2361
      %v2494 = vunpack.c.l.b16 %v2362
      %v2495 = vunpack.c.l.b16 %v2363
      %v2496 = vunpack.c.l.b16 %v2364
      %v2497 = vunpack.c.l.b16 %v2365
      %v2498 = vunpack.c.l.b16 %v2366
      %v2499 = vunpack.c.l.b16 %v2367
      %v2500 = vunpack.c.l.b16 %v2368
      %v2501 = vunpack.c.l.b16 %v2369
      %v2502 = vunpack.c.l.b16 %v2370
      %v2503 = vunpack.c.l.b16 %v2371
      %v2504 = vunpack.c.l.b16 %v2372
      %v2505 = vunpack.c.l.b16 %v2373
      %v2506 = vunpack.c.l.b16 %v2374
      %v2507 = vunpack.c.l.b16 %v2375
      %v2508 = vunpack.c.l.b16 %v2376
      %v2509 = vunpack.c.l.b16 %v2377
      %v2510 = vunpack.c.l.b16 %v2378
      %v2511 = vunpack.c.l.b16 %v2379
      %v2512 = vunpack.c.l.b16 %v2380
      %v2513 = vunpack.c.l.b16 %v2381
      %v2514 = vunpack.c.l.b16 %v2382
      %v2515 = vunpack.c.l.b16 %v2383
      %v2516 = vunpack.c.l.b16 %v2384
      %v2517 = vunpack.c.l.b16 %v2385
      %v2518 = vunpack.c.l.b16 %v2386
      %v2519 = vunpack.c.l.b16 %v2387
      %v2520 = vunpack.c.l.b16 %v2388
      %v2521 = vunpack.c.l.b16 %v2389
      %v2522 = vunpack.c.l.b16 %v2390
      %v2523 = vunpack.c.l.b16 %v2391
      %v2524 = vunpack.c.l.b16 %v2392
      %v2525 = vunpack.c.l.b16 %v2393
      %v2526 = vunpack.c.l.b16 %v2394
      %v2527 = vunpack.c.l.b16 %v2395
      %v2528 = vunpack.c.l.b16 %v2396
      %v2529 = vunpack.c.l.b16 %v2397
      %v2530 = vunpack.c.l.b16 %v2398
      %v2531 = vunpack.c.l.b16 %v2399
      %v2532 = vunpack.c.l.b16 %v2400
      %v2533 = vunpack.c.l.b16 %v2401
      %v2534 = vunpack.c.l.b16 %v2402
      %v2535 = vunpack.c.l.b16 %v2403
      %v2536 = vunpack.c.l.b16 %v2404
      %v2537 = vunpack.c.l.b16 %v2405
      %v2538 = vunpack.c.l.b16 %v2406
      %v2539 = vunpack.c.l.b16 %v2407
      %v2540 = vunpack.c.l.b16 %v2408
      %v2541 = vunpack.c.l.b16 %v2409
      %v2542 = vunpack.c.l.b16 %v2410
      %v2543 = vunpack.c.l.b16 %v2411
      %v2544 = vunpack.c.l.b16 %v2412
      %v2545 = vunpack.c.l.b16 %v2413
      %v2546 = vunpack.c.l.b16 %v2414
      %v2547 = vunpack.c.l.b16 %v2415
      %v2548 = vunpack.c.l.b16 %v2416
      %v2549 = vunpack.c.l.b16 %v2417
      %v2550 = vunpack.c.l.b16 %v2418
      %v2551 = vunpack.c.l.b16 %v2419
      %v2552 = vpack.c.b16 %v2489, %v2488
      %v2553 = vpack.c.b16 %v2491, %v2490
      %v2554 = vpack.c.b16 %v2493, %v2492
      %v2555 = vpack.c.b16 %v2495, %v2494
      %v2556 = vpack.c.b16 %v2497, %v2496
      %v2557 = vpack.c.b16 %v2499, %v2498
      %v2558 = vpack.c.b16 %v2501, %v2500
      %v2559 = vpack.c.b16 %v2503, %v2502
      %v2560 = vpack.c.b16 %v2505, %v2504
      %v2561 = vpack.c.b16 %v2507, %v2506
      %v2562 = vpack.c.b16 %v2509, %v2508
      %v2563 = vpack.c.b16 %v2511, %v2510
      %v2564 = vpack.c.b16 %v2513, %v2512
      %v2565 = vpack.c.b16 %v2515, %v2514
      %v2566 = vpack.c.b16 %v2517, %v2516
      %v2567 = vpack.c.b16 %v2519, %v2518
      %v2568 = vpack.c.b16 %v2521, %v2520
      %v2569 = vpack.c.b16 %v2523, %v2522
      %v2570 = vpack.c.b16 %v2525, %v2524
      %v2571 = vpack.c.b16 %v2527, %v2526
      %v2572 = vpack.c.b16 %v2529, %v2528
      %v2573 = vpack.c.b16 %v2531, %v2530
      %v2574 = vpack.c.b16 %v2533, %v2532
      %v2575 = vpack.c.b16 %v2535, %v2534
      %v2576 = vpack.c.b16 %v2537, %v2536
      %v2577 = vpack.c.b16 %v2539, %v2538
      %v2578 = vpack.c.b16 %v2541, %v2540
      %v2579 = vpack.c.b16 %v2543, %v2542
      %v2580 = vpack.c.b16 %v2545, %v2544
      %v2581 = vpack.c.b16 %v2547, %v2546
      %v2582 = vpack.c.b16 %v2549, %v2548
      %v2583 = vpack.c.b16 %v2551, %v2550
      %2616 = vmatpush.bf16.msra.mxu0 %v2559
      %2617 = vmatpush.bf16.msra.mxu0 %v2558
      %2618 = vmatpush.bf16.msra.mxu0 %v2557
      %2619 = vmatpush.bf16.msra.mxu0 %v2556
      %2620 = vmatpush.bf16.msra.mxu0 %v2555
      %2621 = vmatpush.bf16.msra.mxu0 %v2554
      %2622 = vmatpush.bf16.msra.mxu0 %v2553
      %2623 = vmatpush.bf16.msra.mxu0 %v2552
      %2624 = vmatmul.bf16.gmra.mxu0 %v2304
      %v2625 = vpop.f32.mrf.mxu0
      %v2626 = vadd.f32 %v2422, %v2625
      %v2627 = vpop.f32.mrf.mxu0
      %v2628 = vadd.f32 %v2422, %v2627
      %2629 = vmatmul.bf16.gmra.mxu0 %v2308
      %v2630 = vpop.f32.mrf.mxu0
      %v2631 = vadd.f32 %v2422, %v2630
      %v2632 = vpop.f32.mrf.mxu0
      %v2633 = vadd.f32 %v2422, %v2632
      %2634 = vmatmul.bf16.gmra.mxu0 %v2312
      %v2635 = vpop.f32.mrf.mxu0
      %v2636 = vadd.f32 %v2422, %v2635
      %v2637 = vpop.f32.mrf.mxu0
      %v2638 = vadd.f32 %v2422, %v2637
      %2639 = vmatmul.bf16.gmra.mxu0 %v2316
      %v2640 = vpop.f32.mrf.mxu0
      %v2641 = vadd.f32 %v2422, %v2640
      %v2642 = vpop.f32.mrf.mxu0
      %v2643 = vadd.f32 %v2422, %v2642
      %2644 = vmatmul.bf16.gmra.mxu0 %v2320
      %v2645 = vpop.f32.mrf.mxu0
      %v2646 = vadd.f32 %v2422, %v2645
      %v2647 = vpop.f32.mrf.mxu0
      %v2648 = vadd.f32 %v2422, %v2647
      %2649 = vmatmul.bf16.gmra.mxu0 %v2324
      %v2650 = vpop.f32.mrf.mxu0
      %v2651 = vadd.f32 %v2422, %v2650
      %v2652 = vpop.f32.mrf.mxu0
      %v2653 = vadd.f32 %v2422, %v2652
      %2654 = vmatmul.bf16.gmra.mxu0 %v2328
      %v2655 = vpop.f32.mrf.mxu0
      %v2656 = vadd.f32 %v2422, %v2655
      %v2657 = vpop.f32.mrf.mxu0
      %v2658 = vadd.f32 %v2422, %v2657
      %2659 = vmatmul.bf16.gmra.mxu0 %v2332
      %v2660 = vpop.f32.mrf.mxu0
      %v2661 = vadd.f32 %v2422, %v2660
      %v2662 = vpop.f32.mrf.mxu0
      %v2663 = vadd.f32 %v2422, %v2662
      %2664 = vmatmul.bf16.gmra.mxu0 %v2336
      %v2665 = vpop.f32.mrf.mxu0
      %v2666 = vadd.f32 %v2422, %v2665
      %v2667 = vpop.f32.mrf.mxu0
      %v2668 = vadd.f32 %v2422, %v2667
      %2669 = vmatmul.bf16.gmra.mxu0 %v2340
      %v2670 = vpop.f32.mrf.mxu0
      %v2671 = vadd.f32 %v2422, %v2670
      %v2672 = vpop.f32.mrf.mxu0
      %v2673 = vadd.f32 %v2422, %v2672
      %2674 = vmatmul.bf16.gmra.mxu0 %v2344
      %v2675 = vpop.f32.mrf.mxu0
      %v2676 = vadd.f32 %v2422, %v2675
      %v2677 = vpop.f32.mrf.mxu0
      %v2678 = vadd.f32 %v2422, %v2677
      %2679 = vmatmul.bf16.gmra.mxu0 %v2348
      %v2680 = vpop.f32.mrf.mxu0
      %v2681 = vadd.f32 %v2422, %v2680
      %v2682 = vpop.f32.mrf.mxu0
      %v2683 = vadd.f32 %v2422, %v2682
      %2684 = vmatmul.bf16.gmra.mxu0 %v2352
      %v2685 = vpop.f32.mrf.mxu0
      %v2686 = vadd.f32 %v2422, %v2685
      %v2687 = vpop.f32.mrf.mxu0
      %2688 = vdwg.mxu0
      %2689 = vmatpush.bf16.msra.mxu0 %v2567
      %2690 = vmatpush.bf16.msra.mxu0 %v2566
      %2691 = vmatpush.bf16.msra.mxu0 %v2565
      %2692 = vmatpush.bf16.msra.mxu0 %v2564
      %2693 = vmatpush.bf16.msra.mxu0 %v2563
      %2694 = vmatpush.bf16.msra.mxu0 %v2562
      %2695 = vmatpush.bf16.msra.mxu0 %v2561
      %2696 = vmatpush.bf16.msra.mxu0 %v2560
      %2697 = vmatmul.bf16.gmra.mxu0 %v2305
      %v2698 = vpop.f32.mrf.mxu0
      %v2699 = vadd.f32 %v2626, %v2698
      %v2700 = vpop.f32.mrf.mxu0
      %v2701 = vadd.f32 %v2628, %v2700
      %2702 = vmatmul.bf16.gmra.mxu0 %v2309
      %v2703 = vpop.f32.mrf.mxu0
      %v2704 = vadd.f32 %v2631, %v2703
      %v2705 = vpop.f32.mrf.mxu0
      %v2706 = vadd.f32 %v2633, %v2705
      %2707 = vmatmul.bf16.gmra.mxu0 %v2313
      %v2708 = vpop.f32.mrf.mxu0
      %v2709 = vadd.f32 %v2636, %v2708
      %v2710 = vpop.f32.mrf.mxu0
      %v2711 = vadd.f32 %v2638, %v2710
      %2712 = vmatmul.bf16.gmra.mxu0 %v2317
      %v2713 = vpop.f32.mrf.mxu0
      %v2714 = vadd.f32 %v2641, %v2713
      %v2715 = vpop.f32.mrf.mxu0
      %v2716 = vadd.f32 %v2643, %v2715
      %2717 = vmatmul.bf16.gmra.mxu0 %v2321
      %v2718 = vpop.f32.mrf.mxu0
      %v2719 = vadd.f32 %v2646, %v2718
      %v2720 = vpop.f32.mrf.mxu0
      %v2721 = vadd.f32 %v2648, %v2720
      %2722 = vmatmul.bf16.gmra.mxu0 %v2325
      %v2723 = vpop.f32.mrf.mxu0
      %v2724 = vadd.f32 %v2651, %v2723
      %v2725 = vpop.f32.mrf.mxu0
      %v2726 = vadd.f32 %v2653, %v2725
      %2727 = vmatmul.bf16.gmra.mxu0 %v2329
      %v2728 = vpop.f32.mrf.mxu0
      %v2729 = vadd.f32 %v2656, %v2728
      %v2730 = vpop.f32.mrf.mxu0
      %v2731 = vadd.f32 %v2658, %v2730
      %2732 = vmatmul.bf16.gmra.mxu0 %v2333
      %v2733 = vpop.f32.mrf.mxu0
      %v2734 = vadd.f32 %v2661, %v2733
      %v2735 = vpop.f32.mrf.mxu0
      %v2736 = vadd.f32 %v2663, %v2735
      %2737 = vmatmul.bf16.gmra.mxu0 %v2337
      %v2738 = vpop.f32.mrf.mxu0
      %v2739 = vadd.f32 %v2666, %v2738
      %v2740 = vpop.f32.mrf.mxu0
      %v2741 = vadd.f32 %v2668, %v2740
      %2742 = vmatmul.bf16.gmra.mxu0 %v2341
      %v2743 = vpop.f32.mrf.mxu0
      %v2744 = vadd.f32 %v2671, %v2743
      %v2745 = vpop.f32.mrf.mxu0
      %v2746 = vadd.f32 %v2673, %v2745
      %2747 = vmatmul.bf16.gmra.mxu0 %v2345
      %v2748 = vpop.f32.mrf.mxu0
      %v2749 = vadd.f32 %v2676, %v2748
      %v2750 = vpop.f32.mrf.mxu0
      %v2751 = vadd.f32 %v2678, %v2750
      %2752 = vmatmul.bf16.gmra.mxu0 %v2349
      %v2753 = vpop.f32.mrf.mxu0
      %v2754 = vadd.f32 %v2681, %v2753
      %v2755 = vpop.f32.mrf.mxu0
      %v2756 = vadd.f32 %v2683, %v2755
      %2757 = vmatmul.bf16.gmra.mxu0 %v2353
      %v2758 = vpop.f32.mrf.mxu0
      %v2759 = vadd.f32 %v2686, %v2758
      %v2760 = vpop.f32.mrf.mxu0
      %2761 = vdwg.mxu0
      %2762 = vmatpush.bf16.msra.mxu0 %v2575
      %2763 = vmatpush.bf16.msra.mxu0 %v2574
      %2764 = vmatpush.bf16.msra.mxu0 %v2573
      %2765 = vmatpush.bf16.msra.mxu0 %v2572
      %2766 = vmatpush.bf16.msra.mxu0 %v2571
      %2767 = vmatpush.bf16.msra.mxu0 %v2570
      %2768 = vmatpush.bf16.msra.mxu0 %v2569
      %2769 = vmatpush.bf16.msra.mxu0 %v2568
      %2770 = vmatmul.bf16.gmra.mxu0 %v2306
      %v2771 = vpop.f32.mrf.mxu0
      %v2772 = vadd.f32 %v2699, %v2771
      %v2773 = vpop.f32.mrf.mxu0
      %v2774 = vadd.f32 %v2701, %v2773
      %2775 = vmatmul.bf16.gmra.mxu0 %v2310
      %v2776 = vpop.f32.mrf.mxu0
      %v2777 = vadd.f32 %v2704, %v2776
      %v2778 = vpop.f32.mrf.mxu0
      %v2779 = vadd.f32 %v2706, %v2778
      %2780 = vmatmul.bf16.gmra.mxu0 %v2314
      %v2781 = vpop.f32.mrf.mxu0
      %v2782 = vadd.f32 %v2709, %v2781
      %v2783 = vpop.f32.mrf.mxu0
      %v2784 = vadd.f32 %v2711, %v2783
      %2785 = vmatmul.bf16.gmra.mxu0 %v2318
      %v2786 = vpop.f32.mrf.mxu0
      %v2787 = vadd.f32 %v2714, %v2786
      %v2788 = vpop.f32.mrf.mxu0
      %v2789 = vadd.f32 %v2716, %v2788
      %2790 = vmatmul.bf16.gmra.mxu0 %v2322
      %v2791 = vpop.f32.mrf.mxu0
      %v2792 = vadd.f32 %v2719, %v2791
      %v2793 = vpop.f32.mrf.mxu0
      %v2794 = vadd.f32 %v2721, %v2793
      %2795 = vmatmul.bf16.gmra.mxu0 %v2326
      %v2796 = vpop.f32.mrf.mxu0
      %v2797 = vadd.f32 %v2724, %v2796
      %v2798 = vpop.f32.mrf.mxu0
      %v2799 = vadd.f32 %v2726, %v2798
      %2800 = vmatmul.bf16.gmra.mxu0 %v2330
      %v2801 = vpop.f32.mrf.mxu0
      %v2802 = vadd.f32 %v2729, %v2801
      %v2803 = vpop.f32.mrf.mxu0
      %v2804 = vadd.f32 %v2731, %v2803
      %2805 = vmatmul.bf16.gmra.mxu0 %v2334
      %v2806 = vpop.f32.mrf.mxu0
      %v2807 = vadd.f32 %v2734, %v2806
      %v2808 = vpop.f32.mrf.mxu0
      %v2809 = vadd.f32 %v2736, %v2808
      %2810 = vmatmul.bf16.gmra.mxu0 %v2338
      %v2811 = vpop.f32.mrf.mxu0
      %v2812 = vadd.f32 %v2739, %v2811
      %v2813 = vpop.f32.mrf.mxu0
      %v2814 = vadd.f32 %v2741, %v2813
      %2815 = vmatmul.bf16.gmra.mxu0 %v2342
      %v2816 = vpop.f32.mrf.mxu0
      %v2817 = vadd.f32 %v2744, %v2816
      %v2818 = vpop.f32.mrf.mxu0
      %v2819 = vadd.f32 %v2746, %v2818
      %2820 = vmatmul.bf16.gmra.mxu0 %v2346
      %v2821 = vpop.f32.mrf.mxu0
      %v2822 = vadd.f32 %v2749, %v2821
      %v2823 = vpop.f32.mrf.mxu0
      %v2824 = vadd.f32 %v2751, %v2823
      %2825 = vmatmul.bf16.gmra.mxu0 %v2350
      %v2826 = vpop.f32.mrf.mxu0
      %v2827 = vadd.f32 %v2754, %v2826
      %v2828 = vpop.f32.mrf.mxu0
      %v2829 = vadd.f32 %v2756, %v2828
      %2830 = vmatmul.bf16.gmra.mxu0 %v2354
      %v2831 = vpop.f32.mrf.mxu0
      %v2832 = vadd.f32 %v2759, %v2831
      %v2833 = vpop.f32.mrf.mxu0
      %2834 = vdwg.mxu0
      %2835 = vmatpush.bf16.msra.mxu0 %v2583
      %2836 = vmatpush.bf16.msra.mxu0 %v2582
      %2837 = vmatpush.bf16.msra.mxu0 %v2581
      %2838 = vmatpush.bf16.msra.mxu0 %v2580
      %2839 = vmatpush.bf16.msra.mxu0 %v2579
      %2840 = vmatpush.bf16.msra.mxu0 %v2578
      %2841 = vmatpush.bf16.msra.mxu0 %v2577
      %2842 = vmatpush.bf16.msra.mxu0 %v2576
      %2843 = vmatmul.bf16.gmra.mxu0 %v2307
      %v2844 = vpop.f32.mrf.mxu0
      %v2845 = vadd.f32 %v2772, %v2844
      %v2846 = vpop.f32.mrf.mxu0
      %v2847 = vadd.f32 %v2774, %v2846
      %2848 = vmatmul.bf16.gmra.mxu0 %v2311
      %v2849 = vpop.f32.mrf.mxu0
      %v2850 = vadd.f32 %v2777, %v2849
      %v2851 = vpop.f32.mrf.mxu0
      %v2852 = vadd.f32 %v2779, %v2851
      %2853 = vmatmul.bf16.gmra.mxu0 %v2315
      %v2854 = vpop.f32.mrf.mxu0
      %v2855 = vadd.f32 %v2782, %v2854
      %v2856 = vpop.f32.mrf.mxu0
      %v2857 = vadd.f32 %v2784, %v2856
      %2858 = vmatmul.bf16.gmra.mxu0 %v2319
      %v2859 = vpop.f32.mrf.mxu0
      %v2860 = vadd.f32 %v2787, %v2859
      %v2861 = vpop.f32.mrf.mxu0
      %v2862 = vadd.f32 %v2789, %v2861
      %2863 = vmatmul.bf16.gmra.mxu0 %v2323
      %v2864 = vpop.f32.mrf.mxu0
      %v2865 = vadd.f32 %v2792, %v2864
      %v2866 = vpop.f32.mrf.mxu0
      %v2867 = vadd.f32 %v2794, %v2866
      %2868 = vmatmul.bf16.gmra.mxu0 %v2327
      %v2869 = vpop.f32.mrf.mxu0
      %v2870 = vadd.f32 %v2797, %v2869
      %v2871 = vpop.f32.mrf.mxu0
      %v2872 = vadd.f32 %v2799, %v2871
      %2873 = vmatmul.bf16.gmra.mxu0 %v2331
      %v2874 = vpop.f32.mrf.mxu0
      %v2875 = vadd.f32 %v2802, %v2874
      %v2876 = vpop.f32.mrf.mxu0
      %v2877 = vadd.f32 %v2804, %v2876
      %2878 = vmatmul.bf16.gmra.mxu0 %v2335
      %v2879 = vpop.f32.mrf.mxu0
      %v2880 = vadd.f32 %v2807, %v2879
      %v2881 = vpop.f32.mrf.mxu0
      %v2882 = vadd.f32 %v2809, %v2881
      %2883 = vmatmul.bf16.gmra.mxu0 %v2339
      %v2884 = vpop.f32.mrf.mxu0
      %v2885 = vadd.f32 %v2812, %v2884
      %v2886 = vpop.f32.mrf.mxu0
      %v2887 = vadd.f32 %v2814, %v2886
      %2888 = vmatmul.bf16.gmra.mxu0 %v2343
      %v2889 = vpop.f32.mrf.mxu0
      %v2890 = vadd.f32 %v2817, %v2889
      %v2891 = vpop.f32.mrf.mxu0
      %v2892 = vadd.f32 %v2819, %v2891
      %2893 = vmatmul.bf16.gmra.mxu0 %v2347
      %v2894 = vpop.f32.mrf.mxu0
      %v2895 = vadd.f32 %v2822, %v2894
      %v2896 = vpop.f32.mrf.mxu0
      %v2897 = vadd.f32 %v2824, %v2896
      %2898 = vmatmul.bf16.gmra.mxu0 %v2351
      %v2899 = vpop.f32.mrf.mxu0
      %v2900 = vadd.f32 %v2827, %v2899
      %v2901 = vpop.f32.mrf.mxu0
      %v2902 = vadd.f32 %v2829, %v2901
      %2903 = vmatmul.bf16.gmra.mxu0 %v2355
      %v2904 = vpop.f32.mrf.mxu0
      %v2905 = vadd.f32 %v2832, %v2904
      %v2906 = vpop.f32.mrf.mxu0
      %2907 = vdwg.mxu0
      %v2908 = vadd.f32 %v2845, %v307
      %v2909 = vadd.f32 %v2847, %v308
      %v2910 = vadd.f32 %v2850, %v309
      %v2911 = vadd.f32 %v2852, %v310
      %v2912 = vadd.f32 %v2855, %v311
      %v2913 = vadd.f32 %v2857, %v312
      %v2914 = vadd.f32 %v2860, %v313
      %v2915 = vadd.f32 %v2862, %v314
      %v2916 = vadd.f32 %v2865, %v315
      %v2917 = vadd.f32 %v2867, %v316
      %v2918 = vadd.f32 %v2870, %v317
      %v2919 = vadd.f32 %v2872, %v318
      %v2920 = vadd.f32 %v2875, %v319
      %v2921 = vadd.f32 %v2877, %v320
      %v2922 = vadd.f32 %v2880, %v321
      %v2923 = vadd.f32 %v2882, %v322
      %v2924 = vadd.f32 %v2885, %v323
      %v2925 = vadd.f32 %v2887, %v324
      %v2926 = vadd.f32 %v2890, %v325
      %v2927 = vadd.f32 %v2892, %v326
      %v2928 = vadd.f32 %v2895, %v327
      %v2929 = vadd.f32 %v2897, %v328
      %v2930 = vadd.f32 %v2900, %v329
      %v2931 = vadd.f32 %v2902, %v330
      %v2932 = vadd.f32 %v2905, %v331
      %v2933 = vpack.c.bf16 %v2908, %v2908
      %v2934 = vpack.c.bf16 %v2909, %v2909
      %v2935 = vpack.c.bf16 %v2910, %v2910
      %v2936 = vpack.c.bf16 %v2911, %v2911
      %v2937 = vpack.c.bf16 %v2912, %v2912
      %v2938 = vpack.c.bf16 %v2913, %v2913
      %v2939 = vpack.c.bf16 %v2914, %v2914
      %v2940 = vpack.c.bf16 %v2915, %v2915
      %v2941 = vpack.c.bf16 %v2916, %v2916
      %v2942 = vpack.c.bf16 %v2917, %v2917
      %v2943 = vpack.c.bf16 %v2918, %v2918
      %v2944 = vpack.c.bf16 %v2919, %v2919
      %v2945 = vpack.c.bf16 %v2920, %v2920
      %v2946 = vpack.c.bf16 %v2921, %v2921
      %v2947 = vpack.c.bf16 %v2922, %v2922
      %v2948 = vpack.c.bf16 %v2923, %v2923
      %v2949 = vpack.c.bf16 %v2924, %v2924
      %v2950 = vpack.c.bf16 %v2925, %v2925
      %v2951 = vpack.c.bf16 %v2926, %v2926
      %v2952 = vpack.c.bf16 %v2927, %v2927
      %v2953 = vpack.c.bf16 %v2928, %v2928
      %v2954 = vpack.c.bf16 %v2929, %v2929
      %v2955 = vpack.c.bf16 %v2930, %v2930
      %v2956 = vpack.c.bf16 %v2931, %v2931
      %v2957 = vpack.c.bf16 %v2932, %v2932
      %2958 = vst [vmem:[%s280] sm:$0xf] %v2933
      %2959 = vst [vmem:[%s280 + $0x4] sm:$0xf] %v2934
      %2960 = vst [vmem:[%s280 + $0x8] sm:$0xf] %v2935
      %2961 = vst [vmem:[%s280 + $0xc] sm:$0xf] %v2936
      %2962 = vst [vmem:[%s280 + $0x10] sm:$0xf] %v2937
      %2963 = vst [vmem:[%s280 + $0x14] sm:$0xf] %v2938
      %2964 = vst [vmem:[%s280 + $0x18] sm:$0xf] %v2939
      %2965 = vst [vmem:[%s280 + $0x1c] sm:$0xf] %v2940
      %2966 = vst [vmem:[%s280 + $0x20] sm:$0xf] %v2941
      %2967 = vst [vmem:[%s280 + $0x24] sm:$0xf] %v2942
      %2968 = vst [vmem:[%s280 + $0x28] sm:$0xf] %v2943
      %2969 = vst [vmem:[%s280 + $0x2c] sm:$0xf] %v2944
      %2970 = vst [vmem:[%s280 + $0x30] sm:$0xf] %v2945
      %2971 = vst [vmem:[%s280 + $0x34] sm:$0xf] %v2946
      %2972 = vst [vmem:[%s280 + $0x38] sm:$0xf] %v2947
      %2973 = vst [vmem:[%s280 + $0x3c] sm:$0xf] %v2948
      %2974 = vst [vmem:[%s280 + $0x40] sm:$0xf] %v2949
      %2975 = vst [vmem:[%s280 + $0x44] sm:$0xf] %v2950
      %2976 = vst [vmem:[%s280 + $0x48] sm:$0xf] %v2951
      %2977 = vst [vmem:[%s280 + $0x4c] sm:$0xf] %v2952
      %2978 = vst [vmem:[%s280 + $0x50] sm:$0xf] %v2953
      %2979 = vst [vmem:[%s280 + $0x54] sm:$0xf] %v2954
      %2980 = vst [vmem:[%s280 + $0x58] sm:$0xf] %v2955
      %2981 = vst [vmem:[%s280 + $0x5c] sm:$0xf] %v2956
      %2982 = vst [vmem:[%s280 + $0x60] sm:$0xf] %v2957
      %s2983 = smul.u32 25, %s18
      %p2984 = scmp.lt.s32.totalorder %s2983, 49
      %s2985 = scalar_select %p2984, %s2983, 49
      %s2986 = smul.addr %s2985, 4
      %s2987 = scalar_lea.vmem %s7, %s2986
      // Predicated region
      $region49: #{prenorm_residual.1} parent=47 // pred_check
        %p2988 = pneg %p188
      $region50: #{prenorm_residual.1} parent=47 // pred_check_branch
        %2990 = sbr.rel (%p2988) target = $region52
      $region51: #{prenorm_residual.1} parent=47 // pred_region
        %s2991 = smul.u32 25, %s18
      $region52: #{prenorm_residual.1} parent=47 // pred_fallthru
        _
    $region48: #{prenorm_residual.1} parent=5 // pred_fallthru
      _
    %p2992 = scmp.le.s32.totalorder 2, %s13
    // Predicated region
    $region53: #{prenorm_residual.1} parent=5 // pred_check
      %p2993 = pneg %p2992
    $region54: #{prenorm_residual.1} parent=5 // pred_check_branch
      %2995 = sbr.rel (%p2993) target = $region56
    $region55: #{prenorm_residual.1} parent=5 // pred_region
      %s2996 = ssub.s32 %s13, 2
      // Predicated region
      $region57: #{prenorm_residual.1} parent=55 // pred_check
        %p2997 = pneg %p194
      $region58: #{prenorm_residual.1} parent=55 // pred_check_branch
        %2999 = sbr.rel (%p2997) target = $region60
      $region59: #{prenorm_residual.1} parent=55 // pred_region
        %s3000 = smul.u32 25, %s19
        %p3001 = scmp.lt.s32.totalorder %s3000, 49
        %s3002 = scalar_select %p3001, %s3000, 49
        %s3003 = smul.addr %s3002, 4
        %s3004 = scalar_lea.vmem %s7, %s3003
      $region60: #{prenorm_residual.1} parent=55 // pred_fallthru
        _
    $region56: #{prenorm_residual.1} parent=5 // pred_fallthru
      _
  $region6: #{prenorm_residual.1} parent=0 // loop_footer
    %s17 = sadd.s32 1, %s13
  $region7: #{prenorm_residual.1} parent=0 // loop_footer_branch
    %12 = sbr.rel target = $region3
  $region8: #{prenorm_residual.1} parent=0 // loop_exit
    _

</llo_original>
